<compile_context>
chip_gen: v6e
topology: v6e:2x2x1
jax: 0.10.0
libtpu: 0.0.40
codegen_flags: <defaults>
</compile_context>

<pallas_src>
import functools
import math

import jax
import jax.numpy as jnp
from jax.experimental import pallas as pl
from jax.experimental.pallas import tpu as pltpu

LOG_SIG_MAX = 2.0
LOG_SIG_MIN = -20.0

_SMALL_BATCH_SINGLE_BLOCK = 256   # below this, splitting is pure per-step overhead
_ABS_TILE_CAP = 8192              # keep per-step activation footprint sane


def _round_up(x, m):
    return ((x + m - 1) // m) * m


def _vmem_capacity_bytes():
    """Physical VMEM of the local chip; conservative v7x floor as fallback."""
    try:
        info = pltpu.get_tpu_info()
        cap = getattr(info, "vmem_capacity_bytes", None)
        if cap:
            return int(cap)
    except Exception:
        pass
    return 64 * 1024 * 1024  # v7x floor -- safe on every generation


def gaussian_policy_kernel(
    state_ref,
    w1_ref, b1_ref,
    w2_ref, b2_ref,
    w3_ref, b3_ref,
    w4_ref, b4_ref,
    wh_ref, bh_ref,          # fused, lane-padded head: [hidden, Hp], [1, Hp]
    out_ref,                 # lane-dense output slab: [TB, Hp] = mean||log_std||0
    *, num_actions,
):
    x = state_ref[...]

    h = jnp.dot(x, w1_ref[...], preferred_element_type=jnp.float32) + b1_ref[...]
    h = jnp.maximum(h, 0.0)
    h = jnp.dot(h, w2_ref[...], preferred_element_type=jnp.float32) + b2_ref[...]
    h = jnp.maximum(h, 0.0)
    h = jnp.dot(h, w3_ref[...], preferred_element_type=jnp.float32) + b3_ref[...]
    h = jnp.maximum(h, 0.0)
    h = jnp.dot(h, w4_ref[...], preferred_element_type=jnp.float32) + b4_ref[...]
    h = jnp.maximum(h, 0.0)

    # Single fused head: one MXU dot, one unmasked lane-dense store.
    out = jnp.dot(h, wh_ref[...], preferred_element_type=jnp.float32) + bh_ref[...]

    # Clamp only the log_std lanes (col >= num_actions); mean lanes pass
    # through unclamped and the zero-padded lanes are unaffected (clip(0)==0).
    col = jax.lax.broadcasted_iota(jnp.int32, out.shape, 1)
    clipped = jnp.clip(out, LOG_SIG_MIN, LOG_SIG_MAX)
    out = jnp.where(col >= num_actions, clipped, out)

    out_ref[...] = out.astype(out_ref.dtype)


def _plan_tiles(batch, num_inputs, hidden_dim, head_width):
    """Pick (batch_tile, grid_steps, vmem_limit_bytes) from the VMEM budget."""
    itemsize = 4  # f32
    weight_bytes = (
        (num_inputs * hidden_dim + hidden_dim)
        + 3 * (hidden_dim * hidden_dim + hidden_dim)
        + (hidden_dim * head_width + head_width)
    ) * itemsize
    # state + out are double-buffered; ~3 live [TB, hidden] f32 activations.
    per_row_bytes = (2 * num_inputs + 2 * head_width + 3 * hidden_dim) * itemsize

    capacity = _vmem_capacity_bytes()
    # Conservatively budget the weights as double-buffered in case the
    # single-buffer hint is dropped by the fallback path.
    budget = int(capacity * 0.75) - 2 * weight_bytes - (4 << 20)
    if budget <= per_row_bytes * 8:
        tb_cap = 8
    else:
        tb_cap = (budget // per_row_bytes // 8) * 8
    tb_cap = max(8, min(_ABS_TILE_CAP, tb_cap))

    if batch <= min(_SMALL_BATCH_SINGLE_BLOCK, tb_cap):
        tb = batch  # single block == full array dims (always a legal block)
    else:
        # Aim for >= 2 grid steps so v7x can shard across both TensorCores.
        tb = min(tb_cap, _round_up(pl.cdiv(batch, 2), 8))
        tb = max(8, min(tb, batch))

    grid_steps = pl.cdiv(batch, tb)

    needed = (
        2 * weight_bytes
        + 2 * (tb * num_inputs + tb * head_width) * itemsize
        + 3 * tb * hidden_dim * itemsize
        + (4 << 20)
    )
    vmem_limit = int(min(max(needed, 16 << 20), int(capacity * 0.9)))
    return tb, grid_steps, vmem_limit


def gaussian_policy_forward(state, params, num_actions):
    """state: [B, num_inputs] f32.  Returns (mean, log_std), each [B, num_actions]."""
    B, num_inputs = state.shape
    hidden_dim = params["w1"].shape[1]
    head_width = params["wh"].shape[1]  # lane-padded (multiple of 128)

    weight_args = (
        params["w1"], params["b1"],
        params["w2"], params["b2"],
        params["w3"], params["b3"],
        params["w4"], params["b4"],
        params["wh"], params["bh"],
    )

    TB, num_steps, vmem_limit = _plan_tiles(B, num_inputs, hidden_dim, head_width)
    grid = (num_steps,)

    def run(single_buffer_weights):
        weight_spec_kwargs = (
            {"pipeline_mode": pl.Buffered(1)} if single_buffer_weights else {}
        )
        in_specs = [pl.BlockSpec((TB, num_inputs), lambda i: (i, 0))]
        in_specs += [
            pl.BlockSpec(w.shape, lambda i: (0, 0), **weight_spec_kwargs)
            for w in weight_args
        ]
        out_specs = pl.BlockSpec((TB, head_width), lambda i: (i, 0))
        return pl.pallas_call(
            functools.partial(gaussian_policy_kernel, num_actions=num_actions),
            out_shape=jax.ShapeDtypeStruct((B, head_width), jnp.float32),
            grid=grid,
            in_specs=in_specs,
            out_specs=out_specs,
            compiler_params=pltpu.CompilerParams(
                dimension_semantics=("parallel",),
                vmem_limit_bytes=vmem_limit,
            ),
        )(state, *weight_args)

    try:
        fused_out = run(single_buffer_weights=True)
    except Exception:
        # Some jax builds may reject the single-buffer hint on this lowering
        # path; the double-buffered default is still correct (just uses more
        # VMEM for the grid-invariant weights).
        fused_out = run(single_buffer_weights=False)

    mean = fused_out[:, :num_actions]
    log_std = fused_out[:, num_actions : 2 * num_actions]
    return mean, log_std


def xavier_uniform(key, fan_in, fan_out, gain=1.0):
    bound = gain * math.sqrt(6.0 / (fan_in + fan_out))
    # Stored [in, out] for the kernel (PyTorch nn.Linear stores [out, in]).
    return jax.random.uniform(
        key, (fan_in, fan_out), jnp.float32, minval=-bound, maxval=bound
    )


def init_params(key, num_inputs, num_actions, hidden_dim):
    ks = jax.random.split(key, 6)
    wm = xavier_uniform(ks[4], hidden_dim, num_actions)
    ws = xavier_uniform(ks[5], hidden_dim, num_actions)
    # Fused, lane-padded head: columns [0:A] = mean, [A:2A] = log_std, rest 0.
    head_width = _round_up(2 * num_actions, 128)
    wh = jnp.zeros((hidden_dim, head_width), jnp.float32)
    wh = wh.at[:, :num_actions].set(wm)
    wh = wh.at[:, num_actions : 2 * num_actions].set(ws)
    bh = jnp.zeros((1, head_width), jnp.float32)  # PyTorch biases init to 0
    # TODO(synk): for large hidden_dim, store weights in bf16 and cast dot
    # operands to bf16 (keep f32 accumulation) for native MXU throughput.
    return {
        "w1": xavier_uniform(ks[0], num_inputs, hidden_dim),
        "b1": jnp.zeros((1, hidden_dim), jnp.float32),
        "w2": xavier_uniform(ks[1], hidden_dim, hidden_dim),
        "b2": jnp.zeros((1, hidden_dim), jnp.float32),
        "w3": xavier_uniform(ks[2], hidden_dim, hidden_dim),
        "b3": jnp.zeros((1, hidden_dim), jnp.float32),
        "w4": xavier_uniform(ks[3], hidden_dim, hidden_dim),
        "b4": jnp.zeros((1, hidden_dim), jnp.float32),
        "wh": wh,
        "bh": bh,
    }


def reference_forward(state, p, num_actions):
    h = jnp.maximum(state @ p["w1"] + p["b1"], 0.0)
    h = jnp.maximum(h @ p["w2"] + p["b2"], 0.0)
    h = jnp.maximum(h @ p["w3"] + p["b3"], 0.0)
    h = jnp.maximum(h @ p["w4"] + p["b4"], 0.0)
    fused = h @ p["wh"] + p["bh"]
    mean = fused[:, :num_actions]
    log_std = jnp.clip(
        fused[:, num_actions : 2 * num_actions], LOG_SIG_MIN, LOG_SIG_MAX
    )
    return mean, log_std


if __name__ == "__main__":
    key = jax.random.PRNGKey(0)
    k_state, k_state2, k_params = jax.random.split(key, 3)

    num_inputs = 16
    num_actions = 4
    hidden_dim = 32
    params = init_params(k_params, num_inputs, num_actions, hidden_dim)

    # Small batch: single full-dim block, grid=(1,).
    batch = 8
    state = jax.random.normal(k_state, (batch, num_inputs), jnp.float32)
    mean, log_std = gaussian_policy_forward(state, params, num_actions)
    jax.block_until_ready((mean, log_std))
    mean_ref, log_std_ref = reference_forward(state, params, num_actions)
    assert mean.shape == (batch, num_actions)
    assert log_std.shape == (batch, num_actions)
    assert jnp.allclose(mean, mean_ref, atol=1e-5, rtol=1e-5)
    assert jnp.allclose(log_std, log_std_ref, atol=1e-5, rtol=1e-5)

    # Ragged batch: >= 2 grid steps with a partial last block (exercises the
    # dual-TensorCore-friendly tiling and the OOB-masked writeback path).
    batch2 = 300
    state2 = jax.random.normal(k_state2, (batch2, num_inputs), jnp.float32)
    mean2, log_std2 = gaussian_policy_forward(state2, params, num_actions)
    jax.block_until_ready((mean2, log_std2))
    mean2_ref, log_std2_ref = reference_forward(state2, params, num_actions)
    assert jnp.allclose(mean2, mean2_ref, atol=1e-5, rtol=1e-5)
    assert jnp.allclose(log_std2, log_std2_ref, atol=1e-5, rtol=1e-5)

    # TODO(synk): sample() (Normal.rsample + tanh squash + log_prob correction)
    # is stochastic and not part of forward(); only forward() is kernelized.
    print("KERNEL_OK")
</pallas_src>

<mosaic_0001>
module attributes {stable_mosaic.version = 11 : i64} {
  func.func @gaussian_policy_kernel(%arg0: i32, %arg1: memref<8x16xf32, #tpu.memory_space<vmem>>, %arg2: memref<16x32xf32, #tpu.memory_space<vmem>>, %arg3: memref<1x32xf32, #tpu.memory_space<vmem>>, %arg4: memref<32x32xf32, #tpu.memory_space<vmem>>, %arg5: memref<1x32xf32, #tpu.memory_space<vmem>>, %arg6: memref<32x32xf32, #tpu.memory_space<vmem>>, %arg7: memref<1x32xf32, #tpu.memory_space<vmem>>, %arg8: memref<32x32xf32, #tpu.memory_space<vmem>>, %arg9: memref<1x32xf32, #tpu.memory_space<vmem>>, %arg10: memref<32x128xf32, #tpu.memory_space<vmem>>, %arg11: memref<1x128xf32, #tpu.memory_space<vmem>>, %arg12: memref<8x128xf32, #tpu.memory_space<vmem>>) attributes {dimension_semantics = [#tpu.dimension_semantics<parallel>], iteration_bounds = array<i64: 1>, scalar_prefetch = 0 : i64, scratch_operands = 0 : i64, tpu.core_type = #tpu.core_type<tc>, window_params = [{transform_indices = @transform_0, window_bounds = array<i64: 8, 16>}, {pipeline_mode = #tpu.pipeline_mode<synchronous>, transform_indices = @transform_1, window_bounds = array<i64: 16, 32>}, {pipeline_mode = #tpu.pipeline_mode<synchronous>, transform_indices = @transform_2, window_bounds = array<i64: 1, 32>}, {pipeline_mode = #tpu.pipeline_mode<synchronous>, transform_indices = @transform_3, window_bounds = array<i64: 32, 32>}, {pipeline_mode = #tpu.pipeline_mode<synchronous>, transform_indices = @transform_4, window_bounds = array<i64: 1, 32>}, {pipeline_mode = #tpu.pipeline_mode<synchronous>, transform_indices = @transform_5, window_bounds = array<i64: 32, 32>}, {pipeline_mode = #tpu.pipeline_mode<synchronous>, transform_indices = @transform_6, window_bounds = array<i64: 1, 32>}, {pipeline_mode = #tpu.pipeline_mode<synchronous>, transform_indices = @transform_7, window_bounds = array<i64: 32, 32>}, {pipeline_mode = #tpu.pipeline_mode<synchronous>, transform_indices = @transform_8, window_bounds = array<i64: 1, 32>}, {pipeline_mode = #tpu.pipeline_mode<synchronous>, transform_indices = @transform_9, window_bounds = array<i64: 32, 128>}, {pipeline_mode = #tpu.pipeline_mode<synchronous>, transform_indices = @transform_10, window_bounds = array<i64: 1, 128>}, {transform_indices = @transform_11, window_bounds = array<i64: 8, 128>}]} {
    %c0 = arith.constant 0 : index
    %c0_0 = arith.constant 0 : index
    %0 = vector.load %arg1[%c0, %c0_0] : memref<8x16xf32, #tpu.memory_space<vmem>>, vector<8x16xf32>
    %c0_1 = arith.constant 0 : index
    %c0_2 = arith.constant 0 : index
    %1 = vector.load %arg2[%c0_1, %c0_2] : memref<16x32xf32, #tpu.memory_space<vmem>>, vector<16x32xf32>
    %cst = arith.constant dense<0.000000e+00> : vector<8x32xf32>
    %2 = tpu.matmul %0, %1, %cst {dimension_numbers = #tpu.dot_dimension_numbers<[1], [0], [0], [1], [0, 0, 1, 1], [], []>} : vector<8x16xf32>, vector<16x32xf32>, vector<8x32xf32> -> vector<8x32xf32>
    %c0_3 = arith.constant 0 : index
    %c0_4 = arith.constant 0 : index
    %3 = vector.load %arg3[%c0_3, %c0_4] : memref<1x32xf32, #tpu.memory_space<vmem>>, vector<1x32xf32>
    %4 = vector.broadcast %3 : vector<1x32xf32> to vector<8x32xf32>
    %5 = arith.addf %2, %4 : vector<8x32xf32>
    %cst_5 = arith.constant 0.000000e+00 : f32
    %6 = vector.broadcast %cst_5 : f32 to vector<8x32xf32>
    %7 = arith.maximumf %5, %6 : vector<8x32xf32>
    %c0_6 = arith.constant 0 : index
    %c0_7 = arith.constant 0 : index
    %8 = vector.load %arg4[%c0_6, %c0_7] : memref<32x32xf32, #tpu.memory_space<vmem>>, vector<32x32xf32>
    %cst_8 = arith.constant dense<0.000000e+00> : vector<8x32xf32>
    %9 = tpu.matmul %7, %8, %cst_8 {dimension_numbers = #tpu.dot_dimension_numbers<[1], [0], [0], [1], [0, 0, 1, 1], [], []>} : vector<8x32xf32>, vector<32x32xf32>, vector<8x32xf32> -> vector<8x32xf32>
    %c0_9 = arith.constant 0 : index
    %c0_10 = arith.constant 0 : index
    %10 = vector.load %arg5[%c0_9, %c0_10] : memref<1x32xf32, #tpu.memory_space<vmem>>, vector<1x32xf32>
    %11 = vector.broadcast %10 : vector<1x32xf32> to vector<8x32xf32>
    %12 = arith.addf %9, %11 : vector<8x32xf32>
    %cst_11 = arith.constant 0.000000e+00 : f32
    %13 = vector.broadcast %cst_11 : f32 to vector<8x32xf32>
    %14 = arith.maximumf %12, %13 : vector<8x32xf32>
    %c0_12 = arith.constant 0 : index
    %c0_13 = arith.constant 0 : index
    %15 = vector.load %arg6[%c0_12, %c0_13] : memref<32x32xf32, #tpu.memory_space<vmem>>, vector<32x32xf32>
    %cst_14 = arith.constant dense<0.000000e+00> : vector<8x32xf32>
    %16 = tpu.matmul %14, %15, %cst_14 {dimension_numbers = #tpu.dot_dimension_numbers<[1], [0], [0], [1], [0, 0, 1, 1], [], []>} : vector<8x32xf32>, vector<32x32xf32>, vector<8x32xf32> -> vector<8x32xf32>
    %c0_15 = arith.constant 0 : index
    %c0_16 = arith.constant 0 : index
    %17 = vector.load %arg7[%c0_15, %c0_16] : memref<1x32xf32, #tpu.memory_space<vmem>>, vector<1x32xf32>
    %18 = vector.broadcast %17 : vector<1x32xf32> to vector<8x32xf32>
    %19 = arith.addf %16, %18 : vector<8x32xf32>
    %cst_17 = arith.constant 0.000000e+00 : f32
    %20 = vector.broadcast %cst_17 : f32 to vector<8x32xf32>
    %21 = arith.maximumf %19, %20 : vector<8x32xf32>
    %c0_18 = arith.constant 0 : index
    %c0_19 = arith.constant 0 : index
    %22 = vector.load %arg8[%c0_18, %c0_19] : memref<32x32xf32, #tpu.memory_space<vmem>>, vector<32x32xf32>
    %cst_20 = arith.constant dense<0.000000e+00> : vector<8x32xf32>
    %23 = tpu.matmul %21, %22, %cst_20 {dimension_numbers = #tpu.dot_dimension_numbers<[1], [0], [0], [1], [0, 0, 1, 1], [], []>} : vector<8x32xf32>, vector<32x32xf32>, vector<8x32xf32> -> vector<8x32xf32>
    %c0_21 = arith.constant 0 : index
    %c0_22 = arith.constant 0 : index
    %24 = vector.load %arg9[%c0_21, %c0_22] : memref<1x32xf32, #tpu.memory_space<vmem>>, vector<1x32xf32>
    %25 = vector.broadcast %24 : vector<1x32xf32> to vector<8x32xf32>
    %26 = arith.addf %23, %25 : vector<8x32xf32>
    %cst_23 = arith.constant 0.000000e+00 : f32
    %27 = vector.broadcast %cst_23 : f32 to vector<8x32xf32>
    %28 = arith.maximumf %26, %27 : vector<8x32xf32>
    %c0_24 = arith.constant 0 : index
    %c0_25 = arith.constant 0 : index
    %29 = vector.load %arg10[%c0_24, %c0_25] : memref<32x128xf32, #tpu.memory_space<vmem>>, vector<32x128xf32>
    %cst_26 = arith.constant dense<0.000000e+00> : vector<8x128xf32>
    %30 = tpu.matmul %28, %29, %cst_26 {dimension_numbers = #tpu.dot_dimension_numbers<[1], [0], [0], [1], [0, 0, 1, 1], [], []>} : vector<8x32xf32>, vector<32x128xf32>, vector<8x128xf32> -> vector<8x128xf32>
    %c0_27 = arith.constant 0 : index
    %c0_28 = arith.constant 0 : index
    %31 = vector.load %arg11[%c0_27, %c0_28] : memref<1x128xf32, #tpu.memory_space<vmem>>, vector<1x128xf32>
    %32 = vector.broadcast %31 : vector<1x128xf32> to vector<8x128xf32>
    %33 = arith.addf %30, %32 : vector<8x128xf32>
    %34 = tpu.iota {dimensions = array<i32: 1>} : vector<8x128xi32>
    %cst_29 = arith.constant -2.000000e+01 : f32
    %cst_30 = arith.constant 2.000000e+00 : f32
    %35 = vector.broadcast %cst_29 : f32 to vector<8x128xf32>
    %36 = arith.maximumf %35, %33 : vector<8x128xf32>
    %37 = vector.broadcast %cst_30 : f32 to vector<8x128xf32>
    %38 = arith.minimumf %37, %36 : vector<8x128xf32>
    %c4_i32 = arith.constant 4 : i32
    %39 = vector.broadcast %c4_i32 : i32 to vector<8x128xi32>
    %40 = arith.cmpi sge, %34, %39 : vector<8x128xi32>
    %41 = arith.select %40, %38, %33 : vector<8x128xi1>, vector<8x128xf32>
    %c0_31 = arith.constant 0 : index
    %c0_32 = arith.constant 0 : index
    %42 = vector.load %arg12[%c0_31, %c0_32] : memref<8x128xf32, #tpu.memory_space<vmem>>, vector<8x128xf32>
    tpu.vector_store %arg12[%c0_31, %c0_32], %41 {strides = array<i32>} : memref<8x128xf32, #tpu.memory_space<vmem>>, vector<8x128xf32>,
    return
  }
  func.func @transform_0(%arg0: i32) -> (i32, i32) {
    %c0_i32 = arith.constant 0 : i32
    %c0_i32_0 = arith.constant 0 : i32
    return %arg0, %c0_i32 : i32, i32
  }
  func.func @transform_1(%arg0: i32) -> (i32, i32) {
    %c0_i32 = arith.constant 0 : i32
    %c0_i32_0 = arith.constant 0 : i32
    %c0_i32_1 = arith.constant 0 : i32
    return %c0_i32, %c0_i32_0 : i32, i32
  }
  func.func @transform_2(%arg0: i32) -> (i32, i32) {
    %c0_i32 = arith.constant 0 : i32
    %c0_i32_0 = arith.constant 0 : i32
    %c0_i32_1 = arith.constant 0 : i32
    return %c0_i32, %c0_i32_0 : i32, i32
  }
  func.func @transform_3(%arg0: i32) -> (i32, i32) {
    %c0_i32 = arith.constant 0 : i32
    %c0_i32_0 = arith.constant 0 : i32
    %c0_i32_1 = arith.constant 0 : i32
    return %c0_i32, %c0_i32_0 : i32, i32
  }
  func.func @transform_4(%arg0: i32) -> (i32, i32) {
    %c0_i32 = arith.constant 0 : i32
    %c0_i32_0 = arith.constant 0 : i32
    %c0_i32_1 = arith.constant 0 : i32
    return %c0_i32, %c0_i32_0 : i32, i32
  }
  func.func @transform_5(%arg0: i32) -> (i32, i32) {
    %c0_i32 = arith.constant 0 : i32
    %c0_i32_0 = arith.constant 0 : i32
    %c0_i32_1 = arith.constant 0 : i32
    return %c0_i32, %c0_i32_0 : i32, i32
  }
  func.func @transform_6(%arg0: i32) -> (i32, i32) {
    %c0_i32 = arith.constant 0 : i32
    %c0_i32_0 = arith.constant 0 : i32
    %c0_i32_1 = arith.constant 0 : i32
    return %c0_i32, %c0_i32_0 : i32, i32
  }
  func.func @transform_7(%arg0: i32) -> (i32, i32) {
    %c0_i32 = arith.constant 0 : i32
    %c0_i32_0 = arith.constant 0 : i32
    %c0_i32_1 = arith.constant 0 : i32
    return %c0_i32, %c0_i32_0 : i32, i32
  }
  func.func @transform_8(%arg0: i32) -> (i32, i32) {
    %c0_i32 = arith.constant 0 : i32
    %c0_i32_0 = arith.constant 0 : i32
    %c0_i32_1 = arith.constant 0 : i32
    return %c0_i32, %c0_i32_0 : i32, i32
  }
  func.func @transform_9(%arg0: i32) -> (i32, i32) {
    %c0_i32 = arith.constant 0 : i32
    %c0_i32_0 = arith.constant 0 : i32
    %c0_i32_1 = arith.constant 0 : i32
    return %c0_i32, %c0_i32_0 : i32, i32
  }
  func.func @transform_10(%arg0: i32) -> (i32, i32) {
    %c0_i32 = arith.constant 0 : i32
    %c0_i32_0 = arith.constant 0 : i32
    %c0_i32_1 = arith.constant 0 : i32
    return %c0_i32, %c0_i32_0 : i32, i32
  }
  func.func @transform_11(%arg0: i32) -> (i32, i32) {
    %c0_i32 = arith.constant 0 : i32
    %c0_i32_0 = arith.constant 0 : i32
    return %arg0, %c0_i32 : i32, i32
  }
}

module attributes {stable_mosaic.version = 11 : i64} {
  func.func @gaussian_policy_kernel(%arg0: i32, %arg1: memref<8x16xf32, #tpu.memory_space<vmem>>, %arg2: memref<16x32xf32, #tpu.memory_space<vmem>>, %arg3: memref<1x32xf32, #tpu.memory_space<vmem>>, %arg4: memref<32x32xf32, #tpu.memory_space<vmem>>, %arg5: memref<1x32xf32, #tpu.memory_space<vmem>>, %arg6: memref<32x32xf32, #tpu.memory_space<vmem>>, %arg7: memref<1x32xf32, #tpu.memory_space<vmem>>, %arg8: memref<32x32xf32, #tpu.memory_space<vmem>>, %arg9: memref<1x32xf32, #tpu.memory_space<vmem>>, %arg10: memref<32x128xf32, #tpu.memory_space<vmem>>, %arg11: memref<1x128xf32, #tpu.memory_space<vmem>>, %arg12: memref<8x128xf32, #tpu.memory_space<vmem>>) attributes {dimension_semantics = [#tpu.dimension_semantics<parallel>], iteration_bounds = array<i64: 1>, scalar_prefetch = 0 : i64, scratch_operands = 0 : i64, tpu.core_type = #tpu.core_type<tc>, window_params = [{transform_indices = @transform_0, window_bounds = array<i64: 8, 16>}, {pipeline_mode = #tpu.pipeline_mode<synchronous>, transform_indices = @transform_1, window_bounds = array<i64: 16, 32>}, {pipeline_mode = #tpu.pipeline_mode<synchronous>, transform_indices = @transform_2, window_bounds = array<i64: 1, 32>}, {pipeline_mode = #tpu.pipeline_mode<synchronous>, transform_indices = @transform_3, window_bounds = array<i64: 32, 32>}, {pipeline_mode = #tpu.pipeline_mode<synchronous>, transform_indices = @transform_4, window_bounds = array<i64: 1, 32>}, {pipeline_mode = #tpu.pipeline_mode<synchronous>, transform_indices = @transform_5, window_bounds = array<i64: 32, 32>}, {pipeline_mode = #tpu.pipeline_mode<synchronous>, transform_indices = @transform_6, window_bounds = array<i64: 1, 32>}, {pipeline_mode = #tpu.pipeline_mode<synchronous>, transform_indices = @transform_7, window_bounds = array<i64: 32, 32>}, {pipeline_mode = #tpu.pipeline_mode<synchronous>, transform_indices = @transform_8, window_bounds = array<i64: 1, 32>}, {pipeline_mode = #tpu.pipeline_mode<synchronous>, transform_indices = @transform_9, window_bounds = array<i64: 32, 128>}, {pipeline_mode = #tpu.pipeline_mode<synchronous>, transform_indices = @transform_10, window_bounds = array<i64: 1, 128>}, {transform_indices = @transform_11, window_bounds = array<i64: 8, 128>}]} {
    %c0 = arith.constant 0 : index
    %c0_0 = arith.constant 0 : index
    %0 = vector.load %arg1[%c0, %c0_0] : memref<8x16xf32, #tpu.memory_space<vmem>>, vector<8x16xf32>
    %c0_1 = arith.constant 0 : index
    %c0_2 = arith.constant 0 : index
    %1 = vector.load %arg2[%c0_1, %c0_2] : memref<16x32xf32, #tpu.memory_space<vmem>>, vector<16x32xf32>
    %cst = arith.constant dense<0.000000e+00> : vector<8x32xf32>
    %2 = tpu.matmul %0, %1, %cst {dimension_numbers = #tpu.dot_dimension_numbers<[1], [0], [0], [1], [0, 0, 1, 1], [], []>} : vector<8x16xf32>, vector<16x32xf32>, vector<8x32xf32> -> vector<8x32xf32>
    %c0_3 = arith.constant 0 : index
    %c0_4 = arith.constant 0 : index
    %3 = vector.load %arg3[%c0_3, %c0_4] : memref<1x32xf32, #tpu.memory_space<vmem>>, vector<1x32xf32>
    %4 = vector.broadcast %3 : vector<1x32xf32> to vector<8x32xf32>
    %5 = arith.addf %2, %4 : vector<8x32xf32>
    %cst_5 = arith.constant 0.000000e+00 : f32
    %6 = vector.broadcast %cst_5 : f32 to vector<8x32xf32>
    %7 = arith.maximumf %5, %6 : vector<8x32xf32>
    %c0_6 = arith.constant 0 : index
    %c0_7 = arith.constant 0 : index
    %8 = vector.load %arg4[%c0_6, %c0_7] : memref<32x32xf32, #tpu.memory_space<vmem>>, vector<32x32xf32>
    %cst_8 = arith.constant dense<0.000000e+00> : vector<8x32xf32>
    %9 = tpu.matmul %7, %8, %cst_8 {dimension_numbers = #tpu.dot_dimension_numbers<[1], [0], [0], [1], [0, 0, 1, 1], [], []>} : vector<8x32xf32>, vector<32x32xf32>, vector<8x32xf32> -> vector<8x32xf32>
    %c0_9 = arith.constant 0 : index
    %c0_10 = arith.constant 0 : index
    %10 = vector.load %arg5[%c0_9, %c0_10] : memref<1x32xf32, #tpu.memory_space<vmem>>, vector<1x32xf32>
    %11 = vector.broadcast %10 : vector<1x32xf32> to vector<8x32xf32>
    %12 = arith.addf %9, %11 : vector<8x32xf32>
    %cst_11 = arith.constant 0.000000e+00 : f32
    %13 = vector.broadcast %cst_11 : f32 to vector<8x32xf32>
    %14 = arith.maximumf %12, %13 : vector<8x32xf32>
    %c0_12 = arith.constant 0 : index
    %c0_13 = arith.constant 0 : index
    %15 = vector.load %arg6[%c0_12, %c0_13] : memref<32x32xf32, #tpu.memory_space<vmem>>, vector<32x32xf32>
    %cst_14 = arith.constant dense<0.000000e+00> : vector<8x32xf32>
    %16 = tpu.matmul %14, %15, %cst_14 {dimension_numbers = #tpu.dot_dimension_numbers<[1], [0], [0], [1], [0, 0, 1, 1], [], []>} : vector<8x32xf32>, vector<32x32xf32>, vector<8x32xf32> -> vector<8x32xf32>
    %c0_15 = arith.constant 0 : index
    %c0_16 = arith.constant 0 : index
    %17 = vector.load %arg7[%c0_15, %c0_16] : memref<1x32xf32, #tpu.memory_space<vmem>>, vector<1x32xf32>
    %18 = vector.broadcast %17 : vector<1x32xf32> to vector<8x32xf32>
    %19 = arith.addf %16, %18 : vector<8x32xf32>
    %cst_17 = arith.constant 0.000000e+00 : f32
    %20 = vector.broadcast %cst_17 : f32 to vector<8x32xf32>
    %21 = arith.maximumf %19, %20 : vector<8x32xf32>
    %c0_18 = arith.constant 0 : index
    %c0_19 = arith.constant 0 : index
    %22 = vector.load %arg8[%c0_18, %c0_19] : memref<32x32xf32, #tpu.memory_space<vmem>>, vector<32x32xf32>
    %cst_20 = arith.constant dense<0.000000e+00> : vector<8x32xf32>
    %23 = tpu.matmul %21, %22, %cst_20 {dimension_numbers = #tpu.dot_dimension_numbers<[1], [0], [0], [1], [0, 0, 1, 1], [], []>} : vector<8x32xf32>, vector<32x32xf32>, vector<8x32xf32> -> vector<8x32xf32>
    %c0_21 = arith.constant 0 : index
    %c0_22 = arith.constant 0 : index
    %24 = vector.load %arg9[%c0_21, %c0_22] : memref<1x32xf32, #tpu.memory_space<vmem>>, vector<1x32xf32>
    %25 = vector.broadcast %24 : vector<1x32xf32> to vector<8x32xf32>
    %26 = arith.addf %23, %25 : vector<8x32xf32>
    %cst_23 = arith.constant 0.000000e+00 : f32
    %27 = vector.broadcast %cst_23 : f32 to vector<8x32xf32>
    %28 = arith.maximumf %26, %27 : vector<8x32xf32>
    %c0_24 = arith.constant 0 : index
    %c0_25 = arith.constant 0 : index
    %29 = vector.load %arg10[%c0_24, %c0_25] : memref<32x128xf32, #tpu.memory_space<vmem>>, vector<32x128xf32>
    %cst_26 = arith.constant dense<0.000000e+00> : vector<8x128xf32>
    %30 = tpu.matmul %28, %29, %cst_26 {dimension_numbers = #tpu.dot_dimension_numbers<[1], [0], [0], [1], [0, 0, 1, 1], [], []>} : vector<8x32xf32>, vector<32x128xf32>, vector<8x128xf32> -> vector<8x128xf32>
    %c0_27 = arith.constant 0 : index
    %c0_28 = arith.constant 0 : index
    %31 = vector.load %arg11[%c0_27, %c0_28] : memref<1x128xf32, #tpu.memory_space<vmem>>, vector<1x128xf32>
    %32 = vector.broadcast %31 : vector<1x128xf32> to vector<8x128xf32>
    %33 = arith.addf %30, %32 : vector<8x128xf32>
    %34 = tpu.iota {dimensions = array<i32: 1>} : vector<8x128xi32>
    %cst_29 = arith.constant -2.000000e+01 : f32
    %cst_30 = arith.constant 2.000000e+00 : f32
    %35 = vector.broadcast %cst_29 : f32 to vector<8x128xf32>
    %36 = arith.maximumf %35, %33 : vector<8x128xf32>
    %37 = vector.broadcast %cst_30 : f32 to vector<8x128xf32>
    %38 = arith.minimumf %37, %36 : vector<8x128xf32>
    %c4_i32 = arith.constant 4 : i32
    %39 = vector.broadcast %c4_i32 : i32 to vector<8x128xi32>
    %40 = arith.cmpi sge, %34, %39 : vector<8x128xi32>
    %41 = arith.select %40, %38, %33 : vector<8x128xi1>, vector<8x128xf32>
    %c0_31 = arith.constant 0 : index
    %c0_32 = arith.constant 0 : index
    %42 = vector.load %arg12[%c0_31, %c0_32] : memref<8x128xf32, #tpu.memory_space<vmem>>, vector<8x128xf32>
    tpu.vector_store %arg12[%c0_31, %c0_32], %41 {strides = array<i32>} : memref<8x128xf32, #tpu.memory_space<vmem>>, vector<8x128xf32>,
    return
  }
  func.func @transform_0(%arg0: i32) -> (i32, i32) {
    %c0_i32 = arith.constant 0 : i32
    %c0_i32_0 = arith.constant 0 : i32
    return %arg0, %c0_i32 : i32, i32
  }
  func.func @transform_1(%arg0: i32) -> (i32, i32) {
    %c0_i32 = arith.constant 0 : i32
    %c0_i32_0 = arith.constant 0 : i32
    %c0_i32_1 = arith.constant 0 : i32
    return %c0_i32, %c0_i32_0 : i32, i32
  }
  func.func @transform_2(%arg0: i32) -> (i32, i32) {
    %c0_i32 = arith.constant 0 : i32
    %c0_i32_0 = arith.constant 0 : i32
    %c0_i32_1 = arith.constant 0 : i32
    return %c0_i32, %c0_i32_0 : i32, i32
  }
  func.func @transform_3(%arg0: i32) -> (i32, i32) {
    %c0_i32 = arith.constant 0 : i32
    %c0_i32_0 = arith.constant 0 : i32
    %c0_i32_1 = arith.constant 0 : i32
    return %c0_i32, %c0_i32_0 : i32, i32
  }
  func.func @transform_4(%arg0: i32) -> (i32, i32) {
    %c0_i32 = arith.constant 0 : i32
    %c0_i32_0 = arith.constant 0 : i32
    %c0_i32_1 = arith.constant 0 : i32
    return %c0_i32, %c0_i32_0 : i32, i32
  }
  func.func @transform_5(%arg0: i32) -> (i32, i32) {
    %c0_i32 = arith.constant 0 : i32
    %c0_i32_0 = arith.constant 0 : i32
    %c0_i32_1 = arith.constant 0 : i32
    return %c0_i32, %c0_i32_0 : i32, i32
  }
  func.func @transform_6(%arg0: i32) -> (i32, i32) {
    %c0_i32 = arith.constant 0 : i32
    %c0_i32_0 = arith.constant 0 : i32
    %c0_i32_1 = arith.constant 0 : i32
    return %c0_i32, %c0_i32_0 : i32, i32
  }
  func.func @transform_7(%arg0: i32) -> (i32, i32) {
    %c0_i32 = arith.constant 0 : i32
    %c0_i32_0 = arith.constant 0 : i32
    %c0_i32_1 = arith.constant 0 : i32
    return %c0_i32, %c0_i32_0 : i32, i32
  }
  func.func @transform_8(%arg0: i32) -> (i32, i32) {
    %c0_i32 = arith.constant 0 : i32
    %c0_i32_0 = arith.constant 0 : i32
    %c0_i32_1 = arith.constant 0 : i32
    return %c0_i32, %c0_i32_0 : i32, i32
  }
  func.func @transform_9(%arg0: i32) -> (i32, i32) {
    %c0_i32 = arith.constant 0 : i32
    %c0_i32_0 = arith.constant 0 : i32
    %c0_i32_1 = arith.constant 0 : i32
    return %c0_i32, %c0_i32_0 : i32, i32
  }
  func.func @transform_10(%arg0: i32) -> (i32, i32) {
    %c0_i32 = arith.constant 0 : i32
    %c0_i32_0 = arith.constant 0 : i32
    %c0_i32_1 = arith.constant 0 : i32
    return %c0_i32, %c0_i32_0 : i32, i32
  }
  func.func @transform_11(%arg0: i32) -> (i32, i32) {
    %c0_i32 = arith.constant 0 : i32
    %c0_i32_0 = arith.constant 0 : i32
    return %arg0, %c0_i32 : i32, i32
  }
}

</mosaic_0001>

<llo_original>
// kernel: tpu_custom_call.1
$region0: #{tpu_custom_call.1}
  #allocation0 [shape = 'u32[]', space=smem, size = 0x4, offset = 0x4, fixed_abs, tag = 'smem constant byte address 0x4 - core index']
  #allocation1 [shape = 'u32[144,128]{1,0:T(1,128)}', space=vmem, size = 0x12000, scoped, tag = 'internal scratch']
  %s0 = inlined_call_operand.hbm [shape: f32[8,16], index: 0, kind: input, shape index: {}]
  %s1 = inlined_call_operand.hbm [shape: f32[16,32], index: 1, kind: input, shape index: {}]
  %s2 = inlined_call_operand.vmem [shape: f32[1,32], index: 2, kind: input, shape index: {}]
  %s3 = inlined_call_operand.hbm [shape: f32[32,32], index: 3, kind: input, shape index: {}]
  %s4 = inlined_call_operand.vmem [shape: f32[1,32], index: 4, kind: input, shape index: {}]
  %s5 = inlined_call_operand.hbm [shape: f32[32,32], index: 5, kind: input, shape index: {}]
  %s6 = inlined_call_operand.vmem [shape: f32[1,32], index: 6, kind: input, shape index: {}]
  %s7 = inlined_call_operand.hbm [shape: f32[32,32], index: 7, kind: input, shape index: {}]
  %s8 = inlined_call_operand.vmem [shape: f32[1,32], index: 8, kind: input, shape index: {}]
  %s9 = inlined_call_operand.hbm [shape: f32[32,128], index: 9, kind: input, shape index: {}]
  %s10 = inlined_call_operand.vmem [shape: f32[1,128], index: 10, kind: input, shape index: {}]
  %s11 = inlined_call_operand.hbm [shape: f32[8,128], index: 11, kind: output, shape index: {}]
  %s12 = sld [smem:[#allocation0]]
  $region78: #{tpu_custom_call.1} parent=0
    _
  %s14 = ssub.s32 1, %s12
  %s15 = scalar_select 0, %s14, %s12
  $region1: #{tpu_custom_call.1} parent=0
    #allocation2 [shape = 'u8[4096]{0}', space=vmem, size = 0x1000, scoped, tag = 'input window, operand 0, single buffered']
    #allocation3 [shape = 's32[1]{0}', space=sflag, size = 0x4, scoped, tag = 'scoped memory for tpu_custom_call.1']
    #allocation4 [shape = 's32[1]{0}', space=sflag, size = 0x4, scoped, tag = 'scoped memory for tpu_custom_call.1']
    #allocation5 [shape = 'u8[8192]{0}', space=vmem, size = 0x2000, scoped, tag = 'input window, operand 1, single buffered']
    #allocation6 [shape = 's32[1]{0}', space=sflag, size = 0x4, scoped, tag = 'scoped memory for tpu_custom_call.1']
    #allocation7 [shape = 'u8[16384]{0}', space=vmem, size = 0x4000, scoped, tag = 'input window, operand 3, single buffered']
    #allocation8 [shape = 'u8[16384]{0}', space=vmem, size = 0x4000, scoped, tag = 'input window, operand 5, single buffered']
    #allocation9 [shape = 's32[1]{0}', space=sflag, size = 0x4, scoped, tag = 'scoped memory for tpu_custom_call.1']
    #allocation10 [shape = 'u8[16384]{0}', space=vmem, size = 0x4000, scoped, tag = 'input window, operand 7, single buffered']
    #allocation11 [shape = 'u8[16384]{0}', space=vmem, size = 0x4000, scoped, tag = 'input window, operand 9, single buffered']
    #allocation12 [shape = 's32[1]{0}', space=sflag, size = 0x4, scoped, tag = 'scoped memory for tpu_custom_call.1']
    #allocation13 [shape = 'u8[4096]{0}', space=vmem, size = 0x1000, scoped, tag = 'output window, operand 0, single buffered']
    %16 = vsyncpa [#allocation3], 0
    %17 = vsyncpa [#allocation6], 0
    %18 = vsyncpa [#allocation9], 0
    %19 = vsyncpa [#allocation12], 0
    %20 = vsyncpa [#allocation4], 0
    // Predicated region
    $region2: #{tpu_custom_call.1} parent=1 // pred_check
      _
    $region3: #{tpu_custom_call.1} parent=1 // pred_check_branch
      %22 = sbr.rel (0) target = $region5
    $region4: #{tpu_custom_call.1} parent=1 // pred_region
      %s24 = ssub.s32 128, 128
      %25 = vsyncadd [#allocation3], %s24
      %s27 = sshll.u32 [#allocation2], 4
      %s28 = int_to_ptr.vmem [resolvable:$true] %s27
      %30 = dma.hbm_to_vmem [thread:$0]  %s0, 128, %s28, [#allocation3]
    $region5: #{tpu_custom_call.1} parent=1 // pred_fallthru
      _
    // Predicated region
    $region6: #{tpu_custom_call.1} parent=1 // pred_check
      _
    $region7: #{tpu_custom_call.1} parent=1 // pred_check_branch
      %32 = sbr.rel (0) target = $region9
    $region8: #{tpu_custom_call.1} parent=1 // pred_region
      %s34 = ssub.s32 256, 256
      %35 = vsyncadd [#allocation6], %s34
      %s36 = sshll.u32 [#allocation5], 4
      %s37 = int_to_ptr.vmem [resolvable:$true] %s36
      %42 = dma.hbm_to_vmem [thread:$0]  %s1, 256, %s37, [#allocation6], 128, 128, 8
    $region9: #{tpu_custom_call.1} parent=1 // pred_fallthru
      _
    // Predicated region
    $region10: #{tpu_custom_call.1} parent=1 // pred_check
      _
    $region11: #{tpu_custom_call.1} parent=1 // pred_check_branch
      %44 = sbr.rel (0) target = $region13
    $region12: #{tpu_custom_call.1} parent=1 // pred_region
      _
    $region13: #{tpu_custom_call.1} parent=1 // pred_fallthru
      _
    // Predicated region
    $region14: #{tpu_custom_call.1} parent=1 // pred_check
      _
    $region15: #{tpu_custom_call.1} parent=1 // pred_check_branch
      %46 = sbr.rel (0) target = $region17
    $region16: #{tpu_custom_call.1} parent=1 // pred_region
      %s48 = ssub.s32 512, 512
      %49 = vsyncadd [#allocation6], %s48
      %s50 = sshll.u32 [#allocation7], 4
      %s51 = int_to_ptr.vmem [resolvable:$true] %s50
      %56 = dma.hbm_to_vmem [thread:$0]  %s3, 512, %s51, [#allocation6], 128, 128, 8
    $region17: #{tpu_custom_call.1} parent=1 // pred_fallthru
      _
    // Predicated region
    $region18: #{tpu_custom_call.1} parent=1 // pred_check
      _
    $region19: #{tpu_custom_call.1} parent=1 // pred_check_branch
      %58 = sbr.rel (0) target = $region21
    $region20: #{tpu_custom_call.1} parent=1 // pred_region
      _
    $region21: #{tpu_custom_call.1} parent=1 // pred_fallthru
      _
    // Predicated region
    $region22: #{tpu_custom_call.1} parent=1 // pred_check
      _
    $region23: #{tpu_custom_call.1} parent=1 // pred_check_branch
      %60 = sbr.rel (0) target = $region25
    $region24: #{tpu_custom_call.1} parent=1 // pred_region
      %s62 = ssub.s32 512, 512
      %63 = vsyncadd [#allocation9], %s62
      %s64 = sshll.u32 [#allocation8], 4
      %s65 = int_to_ptr.vmem [resolvable:$true] %s64
      %70 = dma.hbm_to_vmem [thread:$0]  %s5, 512, %s65, [#allocation9], 128, 128, 8
    $region25: #{tpu_custom_call.1} parent=1 // pred_fallthru
      _
    // Predicated region
    $region26: #{tpu_custom_call.1} parent=1 // pred_check
      _
    $region27: #{tpu_custom_call.1} parent=1 // pred_check_branch
      %72 = sbr.rel (0) target = $region29
    $region28: #{tpu_custom_call.1} parent=1 // pred_region
      _
    $region29: #{tpu_custom_call.1} parent=1 // pred_fallthru
      _
    // Predicated region
    $region30: #{tpu_custom_call.1} parent=1 // pred_check
      _
    $region31: #{tpu_custom_call.1} parent=1 // pred_check_branch
      %74 = sbr.rel (0) target = $region33
    $region32: #{tpu_custom_call.1} parent=1 // pred_region
      %s76 = ssub.s32 512, 512
      %77 = vsyncadd [#allocation9], %s76
      %s78 = sshll.u32 [#allocation10], 4
      %s79 = int_to_ptr.vmem [resolvable:$true] %s78
      %84 = dma.hbm_to_vmem [thread:$0]  %s7, 512, %s79, [#allocation9], 128, 128, 8
    $region33: #{tpu_custom_call.1} parent=1 // pred_fallthru
      _
    // Predicated region
    $region34: #{tpu_custom_call.1} parent=1 // pred_check
      _
    $region35: #{tpu_custom_call.1} parent=1 // pred_check_branch
      %86 = sbr.rel (0) target = $region37
    $region36: #{tpu_custom_call.1} parent=1 // pred_region
      _
    $region37: #{tpu_custom_call.1} parent=1 // pred_fallthru
      _
    // Predicated region
    $region38: #{tpu_custom_call.1} parent=1 // pred_check
      _
    $region39: #{tpu_custom_call.1} parent=1 // pred_check_branch
      %88 = sbr.rel (0) target = $region41
    $region40: #{tpu_custom_call.1} parent=1 // pred_region
      %s90 = ssub.s32 512, 512
      %91 = vsyncadd [#allocation12], %s90
      %s92 = sshll.u32 [#allocation11], 4
      %s93 = int_to_ptr.vmem [resolvable:$true] %s92
      %98 = dma.hbm_to_vmem [thread:$0]  %s9, 512, %s93, [#allocation12], 128, 128, 8
    $region41: #{tpu_custom_call.1} parent=1 // pred_fallthru
      _
    // Predicated region
    $region42: #{tpu_custom_call.1} parent=1 // pred_check
      _
    $region43: #{tpu_custom_call.1} parent=1 // pred_check_branch
      %100 = sbr.rel (0) target = $region45
    $region44: #{tpu_custom_call.1} parent=1 // pred_region
      _
    $region45: #{tpu_custom_call.1} parent=1 // pred_fallthru
      _
    // Predicated region
    $region46: #{tpu_custom_call.1} parent=1 // pred_check
      _
    $region47: #{tpu_custom_call.1} parent=1 // pred_check_branch
      %102 = sbr.rel (0) target = $region49
    $region48: #{tpu_custom_call.1} parent=1 // pred_region
      %103 = dma.done [#allocation3], 128
    $region49: #{tpu_custom_call.1} parent=1 // pred_fallthru
      _
    // Predicated region
    $region50: #{tpu_custom_call.1} parent=1 // pred_check
      _
    $region51: #{tpu_custom_call.1} parent=1 // pred_check_branch
      %105 = sbr.rel (0) target = $region53
    $region52: #{tpu_custom_call.1} parent=1 // pred_region
      %106 = dma.done [#allocation6], 256
    $region53: #{tpu_custom_call.1} parent=1 // pred_fallthru
      _
    // Predicated region
    $region54: #{tpu_custom_call.1} parent=1 // pred_check
      _
    $region55: #{tpu_custom_call.1} parent=1 // pred_check_branch
      %108 = sbr.rel (0) target = $region57
    $region56: #{tpu_custom_call.1} parent=1 // pred_region
      %109 = dma.done [#allocation6], 512
    $region57: #{tpu_custom_call.1} parent=1 // pred_fallthru
      _
    // Predicated region
    $region58: #{tpu_custom_call.1} parent=1 // pred_check
      _
    $region59: #{tpu_custom_call.1} parent=1 // pred_check_branch
      %111 = sbr.rel (0) target = $region61
    $region60: #{tpu_custom_call.1} parent=1 // pred_region
      %112 = dma.done [#allocation9], 512
    $region61: #{tpu_custom_call.1} parent=1 // pred_fallthru
      _
    // Predicated region
    $region62: #{tpu_custom_call.1} parent=1 // pred_check
      _
    $region63: #{tpu_custom_call.1} parent=1 // pred_check_branch
      %114 = sbr.rel (0) target = $region65
    $region64: #{tpu_custom_call.1} parent=1 // pred_region
      %115 = dma.done [#allocation9], 512
    $region65: #{tpu_custom_call.1} parent=1 // pred_fallthru
      _
    // Predicated region
    $region66: #{tpu_custom_call.1} parent=1 // pred_check
      _
    $region67: #{tpu_custom_call.1} parent=1 // pred_check_branch
      %117 = sbr.rel (0) target = $region69
    $region68: #{tpu_custom_call.1} parent=1 // pred_region
      %118 = dma.done [#allocation12], 512
    $region69: #{tpu_custom_call.1} parent=1 // pred_fallthru
      _
    %v119 = vld [vmem:[#allocation2] sm:$0xff]
    %v120 = vld [vmem:[#allocation5] sm:$0xff]
    %v121 = vld [vmem:[#allocation5 + $0x8] sm:$0xff]
    %v122 = vld [vmem:[%s2] sm:$0x1]
    %v124 = vlaneseq
    %v125 = vshrl.u32 %v124, 7
    %v126 = vsub.s32 0, %v125
    %v127 = vrot.slane %v122, %v126
    %vm129 = vcmask 130048
    %v131 = vsel %vm129, %v119, 0
    %133 = vmatprep.subr.mxu0 0.0
    %134 = vmatpush1.msra.mxu0 0.0
    %135 = vmatprep.subr.mxu0 0.0
    %136 = vmatpush1.msra.mxu0 0.0
    %137 = vmatprep.subr.mxu0 0.0
    %138 = vmatpush1.msra.mxu0 0.0
    %139 = vmatprep.subr.mxu0 0.0
    %140 = vmatpush1.msra.mxu0 0.0
    %141 = vmatprep.subr.mxu0 0.0
    %142 = vmatpush1.msra.mxu0 0.0
    %143 = vmatprep.subr.mxu0 0.0
    %144 = vmatpush1.msra.mxu0 0.0
    %145 = vmatprep.subr.mxu0 0.0
    %146 = vmatpush1.msra.mxu0 0.0
    %147 = vmatprep.subr.mxu0 0.0
    %148 = vmatpush1.msra.mxu0 0.0
    %149 = vmatprep.subr.mxu0 0.0
    %150 = vmatpush1.msra.mxu0 0.0
    %151 = vmatprep.subr.mxu0 0.0
    %152 = vmatpush1.msra.mxu0 0.0
    %153 = vmatprep.subr.mxu0 0.0
    %154 = vmatpush1.msra.mxu0 0.0
    %155 = vmatprep.subr.mxu0 0.0
    %156 = vmatpush1.msra.mxu0 0.0
    %157 = vmatprep.subr.mxu0 0.0
    %158 = vmatpush1.msra.mxu0 0.0
    %159 = vmatprep.subr.mxu0 0.0
    %160 = vmatpush1.msra.mxu0 0.0
    %161 = vmatprep.subr.mxu0 0.0
    %162 = vmatpush1.msra.mxu0 %v121
    %163 = vmatprep.subr.mxu0 0.0
    %164 = vmatpush1.msra.mxu0 %v120
    %165 = vmatprep.subr.mxu0 0.0
    %166 = vmatpush2.msra.mxu0 0.0
    %167 = vmatprep.subr.mxu0 0.0
    %168 = vmatpush2.msra.mxu0 0.0
    %169 = vmatprep.subr.mxu0 0.0
    %170 = vmatpush2.msra.mxu0 0.0
    %171 = vmatprep.subr.mxu0 0.0
    %172 = vmatpush2.msra.mxu0 0.0
    %173 = vmatprep.subr.mxu0 0.0
    %174 = vmatpush2.msra.mxu0 0.0
    %175 = vmatprep.subr.mxu0 0.0
    %176 = vmatpush2.msra.mxu0 0.0
    %177 = vmatprep.subr.mxu0 0.0
    %178 = vmatpush2.msra.mxu0 0.0
    %179 = vmatprep.subr.mxu0 0.0
    %180 = vmatpush2.msra.mxu0 0.0
    %181 = vmatprep.subr.mxu0 0.0
    %182 = vmatpush2.msra.mxu0 0.0
    %183 = vmatprep.subr.mxu0 0.0
    %184 = vmatpush2.msra.mxu0 0.0
    %185 = vmatprep.subr.mxu0 0.0
    %186 = vmatpush2.msra.mxu0 0.0
    %187 = vmatprep.subr.mxu0 0.0
    %188 = vmatpush2.msra.mxu0 0.0
    %189 = vmatprep.subr.mxu0 0.0
    %190 = vmatpush2.msra.mxu0 0.0
    %191 = vmatprep.subr.mxu0 0.0
    %192 = vmatpush2.msra.mxu0 0.0
    %193 = vmatprep.subr.mxu0 0.0
    %194 = vmatpush2.msra.mxu0 0.0
    %195 = vmatprep.subr.mxu0 0.0
    %196 = vmatpush2.msra.mxu0 0.0
    %197 = vmatprep.mubr.f32.mxu0 0.0
    %198 = vmatmul.mubr.f32.gmra.mxu0 %v131
    %v199 = vpop.f32.mrf.mxu0
    %v200 = vadd.f32 %v127, %v199
    %v201 = vpop.f32.mrf.mxu0
    %202 = vdwg.mxu0
    %v203 = vmax.f32 %v200, 0.0
    %v204 = vld [vmem:[#allocation7] sm:$0xff]
    %v205 = vld [vmem:[#allocation7 + $0x8] sm:$0xff]
    %v206 = vld [vmem:[#allocation7 + $0x10] sm:$0xff]
    %v207 = vld [vmem:[#allocation7 + $0x18] sm:$0xff]
    %v208 = vld [vmem:[%s4] sm:$0x1]
    %v210 = vlaneseq
    %v211 = vshrl.u32 %v210, 7
    %v212 = vsub.s32 0, %v211
    %v213 = vrot.slane %v208, %v212
    %vm215 = vcmask 261120
    %v217 = vsel %vm215, %v203, 0
    %219 = vmatprep.subr.mxu0 0.0
    %220 = vmatpush1.msra.mxu0 0.0
    %221 = vmatprep.subr.mxu0 0.0
    %222 = vmatpush1.msra.mxu0 0.0
    %223 = vmatprep.subr.mxu0 0.0
    %224 = vmatpush1.msra.mxu0 0.0
    %225 = vmatprep.subr.mxu0 0.0
    %226 = vmatpush1.msra.mxu0 0.0
    %227 = vmatprep.subr.mxu0 0.0
    %228 = vmatpush1.msra.mxu0 0.0
    %229 = vmatprep.subr.mxu0 0.0
    %230 = vmatpush1.msra.mxu0 0.0
    %231 = vmatprep.subr.mxu0 0.0
    %232 = vmatpush1.msra.mxu0 0.0
    %233 = vmatprep.subr.mxu0 0.0
    %234 = vmatpush1.msra.mxu0 0.0
    %235 = vmatprep.subr.mxu0 0.0
    %236 = vmatpush1.msra.mxu0 0.0
    %237 = vmatprep.subr.mxu0 0.0
    %238 = vmatpush1.msra.mxu0 0.0
    %239 = vmatprep.subr.mxu0 0.0
    %240 = vmatpush1.msra.mxu0 0.0
    %241 = vmatprep.subr.mxu0 0.0
    %242 = vmatpush1.msra.mxu0 0.0
    %243 = vmatprep.subr.mxu0 0.0
    %244 = vmatpush1.msra.mxu0 %v207
    %245 = vmatprep.subr.mxu0 0.0
    %246 = vmatpush1.msra.mxu0 %v206
    %247 = vmatprep.subr.mxu0 0.0
    %248 = vmatpush1.msra.mxu0 %v205
    %249 = vmatprep.subr.mxu0 0.0
    %250 = vmatpush1.msra.mxu0 %v204
    %251 = vmatprep.subr.mxu0 0.0
    %252 = vmatpush2.msra.mxu0 0.0
    %253 = vmatprep.subr.mxu0 0.0
    %254 = vmatpush2.msra.mxu0 0.0
    %255 = vmatprep.subr.mxu0 0.0
    %256 = vmatpush2.msra.mxu0 0.0
    %257 = vmatprep.subr.mxu0 0.0
    %258 = vmatpush2.msra.mxu0 0.0
    %259 = vmatprep.subr.mxu0 0.0
    %260 = vmatpush2.msra.mxu0 0.0
    %261 = vmatprep.subr.mxu0 0.0
    %262 = vmatpush2.msra.mxu0 0.0
    %263 = vmatprep.subr.mxu0 0.0
    %264 = vmatpush2.msra.mxu0 0.0
    %265 = vmatprep.subr.mxu0 0.0
    %266 = vmatpush2.msra.mxu0 0.0
    %267 = vmatprep.subr.mxu0 0.0
    %268 = vmatpush2.msra.mxu0 0.0
    %269 = vmatprep.subr.mxu0 0.0
    %270 = vmatpush2.msra.mxu0 0.0
    %271 = vmatprep.subr.mxu0 0.0
    %272 = vmatpush2.msra.mxu0 0.0
    %273 = vmatprep.subr.mxu0 0.0
    %274 = vmatpush2.msra.mxu0 0.0
    %275 = vmatprep.subr.mxu0 0.0
    %276 = vmatpush2.msra.mxu0 0.0
    %277 = vmatprep.subr.mxu0 0.0
    %278 = vmatpush2.msra.mxu0 0.0
    %279 = vmatprep.subr.mxu0 0.0
    %280 = vmatpush2.msra.mxu0 0.0
    %281 = vmatprep.subr.mxu0 0.0
    %282 = vmatpush2.msra.mxu0 0.0
    %283 = vmatprep.mubr.f32.mxu0 0.0
    %284 = vmatmul.mubr.f32.gmra.mxu0 %v217
    %v285 = vpop.f32.mrf.mxu0
    %v286 = vadd.f32 %v213, %v285
    %v287 = vpop.f32.mrf.mxu0
    %288 = vdwg.mxu0
    %v289 = vmax.f32 %v286, 0.0
    %v290 = vld [vmem:[#allocation8] sm:$0xff]
    %v291 = vld [vmem:[#allocation8 + $0x8] sm:$0xff]
    %v292 = vld [vmem:[#allocation8 + $0x10] sm:$0xff]
    %v293 = vld [vmem:[#allocation8 + $0x18] sm:$0xff]
    %v294 = vld [vmem:[%s6] sm:$0x1]
    %v296 = vlaneseq
    %v297 = vshrl.u32 %v296, 7
    %v298 = vsub.s32 0, %v297
    %v299 = vrot.slane %v294, %v298
    %v302 = vsel %vm215, %v289, 0
    %304 = vmatprep.subr.mxu0 0.0
    %305 = vmatpush1.msra.mxu0 0.0
    %306 = vmatprep.subr.mxu0 0.0
    %307 = vmatpush1.msra.mxu0 0.0
    %308 = vmatprep.subr.mxu0 0.0
    %309 = vmatpush1.msra.mxu0 0.0
    %310 = vmatprep.subr.mxu0 0.0
    %311 = vmatpush1.msra.mxu0 0.0
    %312 = vmatprep.subr.mxu0 0.0
    %313 = vmatpush1.msra.mxu0 0.0
    %314 = vmatprep.subr.mxu0 0.0
    %315 = vmatpush1.msra.mxu0 0.0
    %316 = vmatprep.subr.mxu0 0.0
    %317 = vmatpush1.msra.mxu0 0.0
    %318 = vmatprep.subr.mxu0 0.0
    %319 = vmatpush1.msra.mxu0 0.0
    %320 = vmatprep.subr.mxu0 0.0
    %321 = vmatpush1.msra.mxu0 0.0
    %322 = vmatprep.subr.mxu0 0.0
    %323 = vmatpush1.msra.mxu0 0.0
    %324 = vmatprep.subr.mxu0 0.0
    %325 = vmatpush1.msra.mxu0 0.0
    %326 = vmatprep.subr.mxu0 0.0
    %327 = vmatpush1.msra.mxu0 0.0
    %328 = vmatprep.subr.mxu0 0.0
    %329 = vmatpush1.msra.mxu0 %v293
    %330 = vmatprep.subr.mxu0 0.0
    %331 = vmatpush1.msra.mxu0 %v292
    %332 = vmatprep.subr.mxu0 0.0
    %333 = vmatpush1.msra.mxu0 %v291
    %334 = vmatprep.subr.mxu0 0.0
    %335 = vmatpush1.msra.mxu0 %v290
    %336 = vmatprep.subr.mxu0 0.0
    %337 = vmatpush2.msra.mxu0 0.0
    %338 = vmatprep.subr.mxu0 0.0
    %339 = vmatpush2.msra.mxu0 0.0
    %340 = vmatprep.subr.mxu0 0.0
    %341 = vmatpush2.msra.mxu0 0.0
    %342 = vmatprep.subr.mxu0 0.0
    %343 = vmatpush2.msra.mxu0 0.0
    %344 = vmatprep.subr.mxu0 0.0
    %345 = vmatpush2.msra.mxu0 0.0
    %346 = vmatprep.subr.mxu0 0.0
    %347 = vmatpush2.msra.mxu0 0.0
    %348 = vmatprep.subr.mxu0 0.0
    %349 = vmatpush2.msra.mxu0 0.0
    %350 = vmatprep.subr.mxu0 0.0
    %351 = vmatpush2.msra.mxu0 0.0
    %352 = vmatprep.subr.mxu0 0.0
    %353 = vmatpush2.msra.mxu0 0.0
    %354 = vmatprep.subr.mxu0 0.0
    %355 = vmatpush2.msra.mxu0 0.0
    %356 = vmatprep.subr.mxu0 0.0
    %357 = vmatpush2.msra.mxu0 0.0
    %358 = vmatprep.subr.mxu0 0.0
    %359 = vmatpush2.msra.mxu0 0.0
    %360 = vmatprep.subr.mxu0 0.0
    %361 = vmatpush2.msra.mxu0 0.0
    %362 = vmatprep.subr.mxu0 0.0
    %363 = vmatpush2.msra.mxu0 0.0
    %364 = vmatprep.subr.mxu0 0.0
    %365 = vmatpush2.msra.mxu0 0.0
    %366 = vmatprep.subr.mxu0 0.0
    %367 = vmatpush2.msra.mxu0 0.0
    %368 = vmatprep.mubr.f32.mxu0 0.0
    %369 = vmatmul.mubr.f32.gmra.mxu0 %v302
    %v370 = vpop.f32.mrf.mxu0
    %v371 = vadd.f32 %v299, %v370
    %v372 = vpop.f32.mrf.mxu0
    %373 = vdwg.mxu0
    %v374 = vmax.f32 %v371, 0.0
    %v375 = vld [vmem:[#allocation10] sm:$0xff]
    %v376 = vld [vmem:[#allocation10 + $0x8] sm:$0xff]
    %v377 = vld [vmem:[#allocation10 + $0x10] sm:$0xff]
    %v378 = vld [vmem:[#allocation10 + $0x18] sm:$0xff]
    %v379 = vld [vmem:[%s8] sm:$0x1]
    %v381 = vlaneseq
    %v382 = vshrl.u32 %v381, 7
    %v383 = vsub.s32 0, %v382
    %v384 = vrot.slane %v379, %v383
    %v387 = vsel %vm215, %v374, 0
    %389 = vmatprep.subr.mxu0 0.0
    %390 = vmatpush1.msra.mxu0 0.0
    %391 = vmatprep.subr.mxu0 0.0
    %392 = vmatpush1.msra.mxu0 0.0
    %393 = vmatprep.subr.mxu0 0.0
    %394 = vmatpush1.msra.mxu0 0.0
    %395 = vmatprep.subr.mxu0 0.0
    %396 = vmatpush1.msra.mxu0 0.0
    %397 = vmatprep.subr.mxu0 0.0
    %398 = vmatpush1.msra.mxu0 0.0
    %399 = vmatprep.subr.mxu0 0.0
    %400 = vmatpush1.msra.mxu0 0.0
    %401 = vmatprep.subr.mxu0 0.0
    %402 = vmatpush1.msra.mxu0 0.0
    %403 = vmatprep.subr.mxu0 0.0
    %404 = vmatpush1.msra.mxu0 0.0
    %405 = vmatprep.subr.mxu0 0.0
    %406 = vmatpush1.msra.mxu0 0.0
    %407 = vmatprep.subr.mxu0 0.0
    %408 = vmatpush1.msra.mxu0 0.0
    %409 = vmatprep.subr.mxu0 0.0
    %410 = vmatpush1.msra.mxu0 0.0
    %411 = vmatprep.subr.mxu0 0.0
    %412 = vmatpush1.msra.mxu0 0.0
    %413 = vmatprep.subr.mxu0 0.0
    %414 = vmatpush1.msra.mxu0 %v378
    %415 = vmatprep.subr.mxu0 0.0
    %416 = vmatpush1.msra.mxu0 %v377
    %417 = vmatprep.subr.mxu0 0.0
    %418 = vmatpush1.msra.mxu0 %v376
    %419 = vmatprep.subr.mxu0 0.0
    %420 = vmatpush1.msra.mxu0 %v375
    %421 = vmatprep.subr.mxu0 0.0
    %422 = vmatpush2.msra.mxu0 0.0
    %423 = vmatprep.subr.mxu0 0.0
    %424 = vmatpush2.msra.mxu0 0.0
    %425 = vmatprep.subr.mxu0 0.0
    %426 = vmatpush2.msra.mxu0 0.0
    %427 = vmatprep.subr.mxu0 0.0
    %428 = vmatpush2.msra.mxu0 0.0
    %429 = vmatprep.subr.mxu0 0.0
    %430 = vmatpush2.msra.mxu0 0.0
    %431 = vmatprep.subr.mxu0 0.0
    %432 = vmatpush2.msra.mxu0 0.0
    %433 = vmatprep.subr.mxu0 0.0
    %434 = vmatpush2.msra.mxu0 0.0
    %435 = vmatprep.subr.mxu0 0.0
    %436 = vmatpush2.msra.mxu0 0.0
    %437 = vmatprep.subr.mxu0 0.0
    %438 = vmatpush2.msra.mxu0 0.0
    %439 = vmatprep.subr.mxu0 0.0
    %440 = vmatpush2.msra.mxu0 0.0
    %441 = vmatprep.subr.mxu0 0.0
    %442 = vmatpush2.msra.mxu0 0.0
    %443 = vmatprep.subr.mxu0 0.0
    %444 = vmatpush2.msra.mxu0 0.0
    %445 = vmatprep.subr.mxu0 0.0
    %446 = vmatpush2.msra.mxu0 0.0
    %447 = vmatprep.subr.mxu0 0.0
    %448 = vmatpush2.msra.mxu0 0.0
    %449 = vmatprep.subr.mxu0 0.0
    %450 = vmatpush2.msra.mxu0 0.0
    %451 = vmatprep.subr.mxu0 0.0
    %452 = vmatpush2.msra.mxu0 0.0
    %453 = vmatprep.mubr.f32.mxu0 0.0
    %454 = vmatmul.mubr.f32.gmra.mxu0 %v387
    %v455 = vpop.f32.mrf.mxu0
    %v456 = vadd.f32 %v384, %v455
    %v457 = vpop.f32.mrf.mxu0
    %458 = vdwg.mxu0
    %v459 = vmax.f32 %v456, 0.0
    %v460 = vld [vmem:[#allocation11] sm:$0xff]
    %v461 = vld [vmem:[#allocation11 + $0x8] sm:$0xff]
    %v462 = vld [vmem:[#allocation11 + $0x10] sm:$0xff]
    %v463 = vld [vmem:[#allocation11 + $0x18] sm:$0xff]
    %v464 = vld [vmem:[%s10] sm:$0x1]
    %v466 = vlaneseq
    %v467 = vshrl.u32 %v466, 7
    %v468 = vsub.s32 0, %v467
    %v469 = vrot.slane %v464, %v468
    %v472 = vsel %vm215, %v459, 0
    %474 = vmatprep.subr.mxu0 0.0
    %475 = vmatpush1.msra.mxu0 0.0
    %476 = vmatprep.subr.mxu0 0.0
    %477 = vmatpush1.msra.mxu0 0.0
    %478 = vmatprep.subr.mxu0 0.0
    %479 = vmatpush1.msra.mxu0 0.0
    %480 = vmatprep.subr.mxu0 0.0
    %481 = vmatpush1.msra.mxu0 0.0
    %482 = vmatprep.subr.mxu0 0.0
    %483 = vmatpush1.msra.mxu0 0.0
    %484 = vmatprep.subr.mxu0 0.0
    %485 = vmatpush1.msra.mxu0 0.0
    %486 = vmatprep.subr.mxu0 0.0
    %487 = vmatpush1.msra.mxu0 0.0
    %488 = vmatprep.subr.mxu0 0.0
    %489 = vmatpush1.msra.mxu0 0.0
    %490 = vmatprep.subr.mxu0 0.0
    %491 = vmatpush1.msra.mxu0 0.0
    %492 = vmatprep.subr.mxu0 0.0
    %493 = vmatpush1.msra.mxu0 0.0
    %494 = vmatprep.subr.mxu0 0.0
    %495 = vmatpush1.msra.mxu0 0.0
    %496 = vmatprep.subr.mxu0 0.0
    %497 = vmatpush1.msra.mxu0 0.0
    %498 = vmatprep.subr.mxu0 0.0
    %499 = vmatpush1.msra.mxu0 %v463
    %500 = vmatprep.subr.mxu0 0.0
    %501 = vmatpush1.msra.mxu0 %v462
    %502 = vmatprep.subr.mxu0 0.0
    %503 = vmatpush1.msra.mxu0 %v461
    %504 = vmatprep.subr.mxu0 0.0
    %505 = vmatpush1.msra.mxu0 %v460
    %506 = vmatprep.subr.mxu0 0.0
    %507 = vmatpush2.msra.mxu0 0.0
    %508 = vmatprep.subr.mxu0 0.0
    %509 = vmatpush2.msra.mxu0 0.0
    %510 = vmatprep.subr.mxu0 0.0
    %511 = vmatpush2.msra.mxu0 0.0
    %512 = vmatprep.subr.mxu0 0.0
    %513 = vmatpush2.msra.mxu0 0.0
    %514 = vmatprep.subr.mxu0 0.0
    %515 = vmatpush2.msra.mxu0 0.0
    %516 = vmatprep.subr.mxu0 0.0
    %517 = vmatpush2.msra.mxu0 0.0
    %518 = vmatprep.subr.mxu0 0.0
    %519 = vmatpush2.msra.mxu0 0.0
    %520 = vmatprep.subr.mxu0 0.0
    %521 = vmatpush2.msra.mxu0 0.0
    %522 = vmatprep.subr.mxu0 0.0
    %523 = vmatpush2.msra.mxu0 0.0
    %524 = vmatprep.subr.mxu0 0.0
    %525 = vmatpush2.msra.mxu0 0.0
    %526 = vmatprep.subr.mxu0 0.0
    %527 = vmatpush2.msra.mxu0 0.0
    %528 = vmatprep.subr.mxu0 0.0
    %529 = vmatpush2.msra.mxu0 0.0
    %530 = vmatprep.subr.mxu0 0.0
    %531 = vmatpush2.msra.mxu0 0.0
    %532 = vmatprep.subr.mxu0 0.0
    %533 = vmatpush2.msra.mxu0 0.0
    %534 = vmatprep.subr.mxu0 0.0
    %535 = vmatpush2.msra.mxu0 0.0
    %536 = vmatprep.subr.mxu0 0.0
    %537 = vmatpush2.msra.mxu0 0.0
    %538 = vmatprep.mubr.f32.mxu0 0.0
    %539 = vmatmul.mubr.f32.gmra.mxu0 %v472
    %v540 = vpop.f32.mrf.mxu0
    %v541 = vadd.f32 %v469, %v540
    %v542 = vpop.f32.mrf.mxu0
    %543 = vdwg.mxu0
    %v544 = vlaneseq
    %v545 = vand.u32 %v544, 127
    %v546 = vmax.f32 %v541, -20.0
    %v547 = vmin.f32 %v546, 2.0
    %vm548 = vcmp.ge.s32.totalorder %v545, 4
    %v549 = vsel %vm548, %v547, %v541
    %550 = vst [vmem:[#allocation13] sm:$0xff] %v549
    // Predicated region
    $region70: #{tpu_custom_call.1} parent=1 // pred_check
      _
    $region71: #{tpu_custom_call.1} parent=1 // pred_check_branch
      %552 = sbr.rel (0) target = $region73
    $region72: #{tpu_custom_call.1} parent=1 // pred_region
      %s554 = ssub.s32 128, 128
      %555 = vsyncadd [#allocation4], %s554
      %s557 = sshll.u32 [#allocation13], 4
      %s558 = int_to_ptr.vmem [resolvable:$true] %s557
      %560 = dma.vmem_to_hbm [thread:$0]  %s558, 128, %s11, [#allocation4]
    $region73: #{tpu_custom_call.1} parent=1 // pred_fallthru
      _
    // Predicated region
    $region74: #{tpu_custom_call.1} parent=1 // pred_check
      _
    $region75: #{tpu_custom_call.1} parent=1 // pred_check_branch
      %562 = sbr.rel (0) target = $region77
    $region76: #{tpu_custom_call.1} parent=1 // pred_region
      %563 = dma.done [#allocation4], 128
    $region77: #{tpu_custom_call.1} parent=1 // pred_fallthru
      _
    %564 = vsyncpa [#allocation3], 1
    %565 = vsyncpa [#allocation6], 1
    %566 = vsyncpa [#allocation9], 1
    %567 = vsyncpa [#allocation12], 1
    %568 = vsyncpa [#allocation4], 1

// kernel: tpu_custom_call.1
$region0: #{tpu_custom_call.1}
  #allocation0 [shape = 'u32[]', space=smem, size = 0x4, offset = 0x4, fixed_abs, tag = 'smem constant byte address 0x4 - core index']
  #allocation1 [shape = 'u32[144,128]{1,0:T(1,128)}', space=vmem, size = 0x12000, scoped, tag = 'internal scratch']
  %s0 = inlined_call_operand.hbm [shape: f32[8,16], index: 0, kind: input, shape index: {}]
  %s1 = inlined_call_operand.hbm [shape: f32[16,32], index: 1, kind: input, shape index: {}]
  %s2 = inlined_call_operand.vmem [shape: f32[1,32], index: 2, kind: input, shape index: {}]
  %s3 = inlined_call_operand.hbm [shape: f32[32,32], index: 3, kind: input, shape index: {}]
  %s4 = inlined_call_operand.vmem [shape: f32[1,32], index: 4, kind: input, shape index: {}]
  %s5 = inlined_call_operand.hbm [shape: f32[32,32], index: 5, kind: input, shape index: {}]
  %s6 = inlined_call_operand.vmem [shape: f32[1,32], index: 6, kind: input, shape index: {}]
  %s7 = inlined_call_operand.hbm [shape: f32[32,32], index: 7, kind: input, shape index: {}]
  %s8 = inlined_call_operand.vmem [shape: f32[1,32], index: 8, kind: input, shape index: {}]
  %s9 = inlined_call_operand.hbm [shape: f32[32,128], index: 9, kind: input, shape index: {}]
  %s10 = inlined_call_operand.vmem [shape: f32[1,128], index: 10, kind: input, shape index: {}]
  %s11 = inlined_call_operand.hbm [shape: f32[8,128], index: 11, kind: output, shape index: {}]
  %s12 = sld [smem:[#allocation0]]
  $region78: #{tpu_custom_call.1} parent=0
    _
  %s14 = ssub.s32 1, %s12
  %s15 = scalar_select 0, %s14, %s12
  $region1: #{tpu_custom_call.1} parent=0
    #allocation2 [shape = 'u8[4096]{0}', space=vmem, size = 0x1000, scoped, tag = 'input window, operand 0, single buffered']
    #allocation3 [shape = 's32[1]{0}', space=sflag, size = 0x4, scoped, tag = 'scoped memory for tpu_custom_call.1']
    #allocation4 [shape = 's32[1]{0}', space=sflag, size = 0x4, scoped, tag = 'scoped memory for tpu_custom_call.1']
    #allocation5 [shape = 'u8[8192]{0}', space=vmem, size = 0x2000, scoped, tag = 'input window, operand 1, single buffered']
    #allocation6 [shape = 's32[1]{0}', space=sflag, size = 0x4, scoped, tag = 'scoped memory for tpu_custom_call.1']
    #allocation7 [shape = 'u8[16384]{0}', space=vmem, size = 0x4000, scoped, tag = 'input window, operand 3, single buffered']
    #allocation8 [shape = 'u8[16384]{0}', space=vmem, size = 0x4000, scoped, tag = 'input window, operand 5, single buffered']
    #allocation9 [shape = 's32[1]{0}', space=sflag, size = 0x4, scoped, tag = 'scoped memory for tpu_custom_call.1']
    #allocation10 [shape = 'u8[16384]{0}', space=vmem, size = 0x4000, scoped, tag = 'input window, operand 7, single buffered']
    #allocation11 [shape = 'u8[16384]{0}', space=vmem, size = 0x4000, scoped, tag = 'input window, operand 9, single buffered']
    #allocation12 [shape = 's32[1]{0}', space=sflag, size = 0x4, scoped, tag = 'scoped memory for tpu_custom_call.1']
    #allocation13 [shape = 'u8[4096]{0}', space=vmem, size = 0x1000, scoped, tag = 'output window, operand 0, single buffered']
    %16 = vsyncpa [#allocation3], 0
    %17 = vsyncpa [#allocation6], 0
    %18 = vsyncpa [#allocation9], 0
    %19 = vsyncpa [#allocation12], 0
    %20 = vsyncpa [#allocation4], 0
    // Predicated region
    $region2: #{tpu_custom_call.1} parent=1 // pred_check
      _
    $region3: #{tpu_custom_call.1} parent=1 // pred_check_branch
      %22 = sbr.rel (0) target = $region5
    $region4: #{tpu_custom_call.1} parent=1 // pred_region
      %s24 = ssub.s32 128, 128
      %25 = vsyncadd [#allocation3], %s24
      %s27 = sshll.u32 [#allocation2], 4
      %s28 = int_to_ptr.vmem [resolvable:$true] %s27
      %30 = dma.hbm_to_vmem [thread:$0]  %s0, 128, %s28, [#allocation3]
    $region5: #{tpu_custom_call.1} parent=1 // pred_fallthru
      _
    // Predicated region
    $region6: #{tpu_custom_call.1} parent=1 // pred_check
      _
    $region7: #{tpu_custom_call.1} parent=1 // pred_check_branch
      %32 = sbr.rel (0) target = $region9
    $region8: #{tpu_custom_call.1} parent=1 // pred_region
      %s34 = ssub.s32 256, 256
      %35 = vsyncadd [#allocation6], %s34
      %s36 = sshll.u32 [#allocation5], 4
      %s37 = int_to_ptr.vmem [resolvable:$true] %s36
      %42 = dma.hbm_to_vmem [thread:$0]  %s1, 256, %s37, [#allocation6], 128, 128, 8
    $region9: #{tpu_custom_call.1} parent=1 // pred_fallthru
      _
    // Predicated region
    $region10: #{tpu_custom_call.1} parent=1 // pred_check
      _
    $region11: #{tpu_custom_call.1} parent=1 // pred_check_branch
      %44 = sbr.rel (0) target = $region13
    $region12: #{tpu_custom_call.1} parent=1 // pred_region
      _
    $region13: #{tpu_custom_call.1} parent=1 // pred_fallthru
      _
    // Predicated region
    $region14: #{tpu_custom_call.1} parent=1 // pred_check
      _
    $region15: #{tpu_custom_call.1} parent=1 // pred_check_branch
      %46 = sbr.rel (0) target = $region17
    $region16: #{tpu_custom_call.1} parent=1 // pred_region
      %s48 = ssub.s32 512, 512
      %49 = vsyncadd [#allocation6], %s48
      %s50 = sshll.u32 [#allocation7], 4
      %s51 = int_to_ptr.vmem [resolvable:$true] %s50
      %56 = dma.hbm_to_vmem [thread:$0]  %s3, 512, %s51, [#allocation6], 128, 128, 8
    $region17: #{tpu_custom_call.1} parent=1 // pred_fallthru
      _
    // Predicated region
    $region18: #{tpu_custom_call.1} parent=1 // pred_check
      _
    $region19: #{tpu_custom_call.1} parent=1 // pred_check_branch
      %58 = sbr.rel (0) target = $region21
    $region20: #{tpu_custom_call.1} parent=1 // pred_region
      _
    $region21: #{tpu_custom_call.1} parent=1 // pred_fallthru
      _
    // Predicated region
    $region22: #{tpu_custom_call.1} parent=1 // pred_check
      _
    $region23: #{tpu_custom_call.1} parent=1 // pred_check_branch
      %60 = sbr.rel (0) target = $region25
    $region24: #{tpu_custom_call.1} parent=1 // pred_region
      %s62 = ssub.s32 512, 512
      %63 = vsyncadd [#allocation9], %s62
      %s64 = sshll.u32 [#allocation8], 4
      %s65 = int_to_ptr.vmem [resolvable:$true] %s64
      %70 = dma.hbm_to_vmem [thread:$0]  %s5, 512, %s65, [#allocation9], 128, 128, 8
    $region25: #{tpu_custom_call.1} parent=1 // pred_fallthru
      _
    // Predicated region
    $region26: #{tpu_custom_call.1} parent=1 // pred_check
      _
    $region27: #{tpu_custom_call.1} parent=1 // pred_check_branch
      %72 = sbr.rel (0) target = $region29
    $region28: #{tpu_custom_call.1} parent=1 // pred_region
      _
    $region29: #{tpu_custom_call.1} parent=1 // pred_fallthru
      _
    // Predicated region
    $region30: #{tpu_custom_call.1} parent=1 // pred_check
      _
    $region31: #{tpu_custom_call.1} parent=1 // pred_check_branch
      %74 = sbr.rel (0) target = $region33
    $region32: #{tpu_custom_call.1} parent=1 // pred_region
      %s76 = ssub.s32 512, 512
      %77 = vsyncadd [#allocation9], %s76
      %s78 = sshll.u32 [#allocation10], 4
      %s79 = int_to_ptr.vmem [resolvable:$true] %s78
      %84 = dma.hbm_to_vmem [thread:$0]  %s7, 512, %s79, [#allocation9], 128, 128, 8
    $region33: #{tpu_custom_call.1} parent=1 // pred_fallthru
      _
    // Predicated region
    $region34: #{tpu_custom_call.1} parent=1 // pred_check
      _
    $region35: #{tpu_custom_call.1} parent=1 // pred_check_branch
      %86 = sbr.rel (0) target = $region37
    $region36: #{tpu_custom_call.1} parent=1 // pred_region
      _
    $region37: #{tpu_custom_call.1} parent=1 // pred_fallthru
      _
    // Predicated region
    $region38: #{tpu_custom_call.1} parent=1 // pred_check
      _
    $region39: #{tpu_custom_call.1} parent=1 // pred_check_branch
      %88 = sbr.rel (0) target = $region41
    $region40: #{tpu_custom_call.1} parent=1 // pred_region
      %s90 = ssub.s32 512, 512
      %91 = vsyncadd [#allocation12], %s90
      %s92 = sshll.u32 [#allocation11], 4
      %s93 = int_to_ptr.vmem [resolvable:$true] %s92
      %98 = dma.hbm_to_vmem [thread:$0]  %s9, 512, %s93, [#allocation12], 128, 128, 8
    $region41: #{tpu_custom_call.1} parent=1 // pred_fallthru
      _
    // Predicated region
    $region42: #{tpu_custom_call.1} parent=1 // pred_check
      _
    $region43: #{tpu_custom_call.1} parent=1 // pred_check_branch
      %100 = sbr.rel (0) target = $region45
    $region44: #{tpu_custom_call.1} parent=1 // pred_region
      _
    $region45: #{tpu_custom_call.1} parent=1 // pred_fallthru
      _
    // Predicated region
    $region46: #{tpu_custom_call.1} parent=1 // pred_check
      _
    $region47: #{tpu_custom_call.1} parent=1 // pred_check_branch
      %102 = sbr.rel (0) target = $region49
    $region48: #{tpu_custom_call.1} parent=1 // pred_region
      %103 = dma.done [#allocation3], 128
    $region49: #{tpu_custom_call.1} parent=1 // pred_fallthru
      _
    // Predicated region
    $region50: #{tpu_custom_call.1} parent=1 // pred_check
      _
    $region51: #{tpu_custom_call.1} parent=1 // pred_check_branch
      %105 = sbr.rel (0) target = $region53
    $region52: #{tpu_custom_call.1} parent=1 // pred_region
      %106 = dma.done [#allocation6], 256
    $region53: #{tpu_custom_call.1} parent=1 // pred_fallthru
      _
    // Predicated region
    $region54: #{tpu_custom_call.1} parent=1 // pred_check
      _
    $region55: #{tpu_custom_call.1} parent=1 // pred_check_branch
      %108 = sbr.rel (0) target = $region57
    $region56: #{tpu_custom_call.1} parent=1 // pred_region
      %109 = dma.done [#allocation6], 512
    $region57: #{tpu_custom_call.1} parent=1 // pred_fallthru
      _
    // Predicated region
    $region58: #{tpu_custom_call.1} parent=1 // pred_check
      _
    $region59: #{tpu_custom_call.1} parent=1 // pred_check_branch
      %111 = sbr.rel (0) target = $region61
    $region60: #{tpu_custom_call.1} parent=1 // pred_region
      %112 = dma.done [#allocation9], 512
    $region61: #{tpu_custom_call.1} parent=1 // pred_fallthru
      _
    // Predicated region
    $region62: #{tpu_custom_call.1} parent=1 // pred_check
      _
    $region63: #{tpu_custom_call.1} parent=1 // pred_check_branch
      %114 = sbr.rel (0) target = $region65
    $region64: #{tpu_custom_call.1} parent=1 // pred_region
      %115 = dma.done [#allocation9], 512
    $region65: #{tpu_custom_call.1} parent=1 // pred_fallthru
      _
    // Predicated region
    $region66: #{tpu_custom_call.1} parent=1 // pred_check
      _
    $region67: #{tpu_custom_call.1} parent=1 // pred_check_branch
      %117 = sbr.rel (0) target = $region69
    $region68: #{tpu_custom_call.1} parent=1 // pred_region
      %118 = dma.done [#allocation12], 512
    $region69: #{tpu_custom_call.1} parent=1 // pred_fallthru
      _
    %v119 = vld [vmem:[#allocation2] sm:$0xff]
    %v120 = vld [vmem:[#allocation5] sm:$0xff]
    %v121 = vld [vmem:[#allocation5 + $0x8] sm:$0xff]
    %v122 = vld [vmem:[%s2] sm:$0x1]
    %v124 = vlaneseq
    %v125 = vshrl.u32 %v124, 7
    %v126 = vsub.s32 0, %v125
    %v127 = vrot.slane %v122, %v126
    %vm129 = vcmask 130048
    %v131 = vsel %vm129, %v119, 0
    %133 = vmatprep.subr.mxu0 0.0
    %134 = vmatpush1.msra.mxu0 0.0
    %135 = vmatprep.subr.mxu0 0.0
    %136 = vmatpush1.msra.mxu0 0.0
    %137 = vmatprep.subr.mxu0 0.0
    %138 = vmatpush1.msra.mxu0 0.0
    %139 = vmatprep.subr.mxu0 0.0
    %140 = vmatpush1.msra.mxu0 0.0
    %141 = vmatprep.subr.mxu0 0.0
    %142 = vmatpush1.msra.mxu0 0.0
    %143 = vmatprep.subr.mxu0 0.0
    %144 = vmatpush1.msra.mxu0 0.0
    %145 = vmatprep.subr.mxu0 0.0
    %146 = vmatpush1.msra.mxu0 0.0
    %147 = vmatprep.subr.mxu0 0.0
    %148 = vmatpush1.msra.mxu0 0.0
    %149 = vmatprep.subr.mxu0 0.0
    %150 = vmatpush1.msra.mxu0 0.0
    %151 = vmatprep.subr.mxu0 0.0
    %152 = vmatpush1.msra.mxu0 0.0
    %153 = vmatprep.subr.mxu0 0.0
    %154 = vmatpush1.msra.mxu0 0.0
    %155 = vmatprep.subr.mxu0 0.0
    %156 = vmatpush1.msra.mxu0 0.0
    %157 = vmatprep.subr.mxu0 0.0
    %158 = vmatpush1.msra.mxu0 0.0
    %159 = vmatprep.subr.mxu0 0.0
    %160 = vmatpush1.msra.mxu0 0.0
    %161 = vmatprep.subr.mxu0 0.0
    %162 = vmatpush1.msra.mxu0 %v121
    %163 = vmatprep.subr.mxu0 0.0
    %164 = vmatpush1.msra.mxu0 %v120
    %165 = vmatprep.subr.mxu0 0.0
    %166 = vmatpush2.msra.mxu0 0.0
    %167 = vmatprep.subr.mxu0 0.0
    %168 = vmatpush2.msra.mxu0 0.0
    %169 = vmatprep.subr.mxu0 0.0
    %170 = vmatpush2.msra.mxu0 0.0
    %171 = vmatprep.subr.mxu0 0.0
    %172 = vmatpush2.msra.mxu0 0.0
    %173 = vmatprep.subr.mxu0 0.0
    %174 = vmatpush2.msra.mxu0 0.0
    %175 = vmatprep.subr.mxu0 0.0
    %176 = vmatpush2.msra.mxu0 0.0
    %177 = vmatprep.subr.mxu0 0.0
    %178 = vmatpush2.msra.mxu0 0.0
    %179 = vmatprep.subr.mxu0 0.0
    %180 = vmatpush2.msra.mxu0 0.0
    %181 = vmatprep.subr.mxu0 0.0
    %182 = vmatpush2.msra.mxu0 0.0
    %183 = vmatprep.subr.mxu0 0.0
    %184 = vmatpush2.msra.mxu0 0.0
    %185 = vmatprep.subr.mxu0 0.0
    %186 = vmatpush2.msra.mxu0 0.0
    %187 = vmatprep.subr.mxu0 0.0
    %188 = vmatpush2.msra.mxu0 0.0
    %189 = vmatprep.subr.mxu0 0.0
    %190 = vmatpush2.msra.mxu0 0.0
    %191 = vmatprep.subr.mxu0 0.0
    %192 = vmatpush2.msra.mxu0 0.0
    %193 = vmatprep.subr.mxu0 0.0
    %194 = vmatpush2.msra.mxu0 0.0
    %195 = vmatprep.subr.mxu0 0.0
    %196 = vmatpush2.msra.mxu0 0.0
    %197 = vmatprep.mubr.f32.mxu0 0.0
    %198 = vmatmul.mubr.f32.gmra.mxu0 %v131
    %v199 = vpop.f32.mrf.mxu0
    %v200 = vadd.f32 %v127, %v199
    %v201 = vpop.f32.mrf.mxu0
    %202 = vdwg.mxu0
    %v203 = vmax.f32 %v200, 0.0
    %v204 = vld [vmem:[#allocation7] sm:$0xff]
    %v205 = vld [vmem:[#allocation7 + $0x8] sm:$0xff]
    %v206 = vld [vmem:[#allocation7 + $0x10] sm:$0xff]
    %v207 = vld [vmem:[#allocation7 + $0x18] sm:$0xff]
    %v208 = vld [vmem:[%s4] sm:$0x1]
    %v210 = vlaneseq
    %v211 = vshrl.u32 %v210, 7
    %v212 = vsub.s32 0, %v211
    %v213 = vrot.slane %v208, %v212
    %vm215 = vcmask 261120
    %v217 = vsel %vm215, %v203, 0
    %219 = vmatprep.subr.mxu0 0.0
    %220 = vmatpush1.msra.mxu0 0.0
    %221 = vmatprep.subr.mxu0 0.0
    %222 = vmatpush1.msra.mxu0 0.0
    %223 = vmatprep.subr.mxu0 0.0
    %224 = vmatpush1.msra.mxu0 0.0
    %225 = vmatprep.subr.mxu0 0.0
    %226 = vmatpush1.msra.mxu0 0.0
    %227 = vmatprep.subr.mxu0 0.0
    %228 = vmatpush1.msra.mxu0 0.0
    %229 = vmatprep.subr.mxu0 0.0
    %230 = vmatpush1.msra.mxu0 0.0
    %231 = vmatprep.subr.mxu0 0.0
    %232 = vmatpush1.msra.mxu0 0.0
    %233 = vmatprep.subr.mxu0 0.0
    %234 = vmatpush1.msra.mxu0 0.0
    %235 = vmatprep.subr.mxu0 0.0
    %236 = vmatpush1.msra.mxu0 0.0
    %237 = vmatprep.subr.mxu0 0.0
    %238 = vmatpush1.msra.mxu0 0.0
    %239 = vmatprep.subr.mxu0 0.0
    %240 = vmatpush1.msra.mxu0 0.0
    %241 = vmatprep.subr.mxu0 0.0
    %242 = vmatpush1.msra.mxu0 0.0
    %243 = vmatprep.subr.mxu0 0.0
    %244 = vmatpush1.msra.mxu0 %v207
    %245 = vmatprep.subr.mxu0 0.0
    %246 = vmatpush1.msra.mxu0 %v206
    %247 = vmatprep.subr.mxu0 0.0
    %248 = vmatpush1.msra.mxu0 %v205
    %249 = vmatprep.subr.mxu0 0.0
    %250 = vmatpush1.msra.mxu0 %v204
    %251 = vmatprep.subr.mxu0 0.0
    %252 = vmatpush2.msra.mxu0 0.0
    %253 = vmatprep.subr.mxu0 0.0
    %254 = vmatpush2.msra.mxu0 0.0
    %255 = vmatprep.subr.mxu0 0.0
    %256 = vmatpush2.msra.mxu0 0.0
    %257 = vmatprep.subr.mxu0 0.0
    %258 = vmatpush2.msra.mxu0 0.0
    %259 = vmatprep.subr.mxu0 0.0
    %260 = vmatpush2.msra.mxu0 0.0
    %261 = vmatprep.subr.mxu0 0.0
    %262 = vmatpush2.msra.mxu0 0.0
    %263 = vmatprep.subr.mxu0 0.0
    %264 = vmatpush2.msra.mxu0 0.0
    %265 = vmatprep.subr.mxu0 0.0
    %266 = vmatpush2.msra.mxu0 0.0
    %267 = vmatprep.subr.mxu0 0.0
    %268 = vmatpush2.msra.mxu0 0.0
    %269 = vmatprep.subr.mxu0 0.0
    %270 = vmatpush2.msra.mxu0 0.0
    %271 = vmatprep.subr.mxu0 0.0
    %272 = vmatpush2.msra.mxu0 0.0
    %273 = vmatprep.subr.mxu0 0.0
    %274 = vmatpush2.msra.mxu0 0.0
    %275 = vmatprep.subr.mxu0 0.0
    %276 = vmatpush2.msra.mxu0 0.0
    %277 = vmatprep.subr.mxu0 0.0
    %278 = vmatpush2.msra.mxu0 0.0
    %279 = vmatprep.subr.mxu0 0.0
    %280 = vmatpush2.msra.mxu0 0.0
    %281 = vmatprep.subr.mxu0 0.0
    %282 = vmatpush2.msra.mxu0 0.0
    %283 = vmatprep.mubr.f32.mxu0 0.0
    %284 = vmatmul.mubr.f32.gmra.mxu0 %v217
    %v285 = vpop.f32.mrf.mxu0
    %v286 = vadd.f32 %v213, %v285
    %v287 = vpop.f32.mrf.mxu0
    %288 = vdwg.mxu0
    %v289 = vmax.f32 %v286, 0.0
    %v290 = vld [vmem:[#allocation8] sm:$0xff]
    %v291 = vld [vmem:[#allocation8 + $0x8] sm:$0xff]
    %v292 = vld [vmem:[#allocation8 + $0x10] sm:$0xff]
    %v293 = vld [vmem:[#allocation8 + $0x18] sm:$0xff]
    %v294 = vld [vmem:[%s6] sm:$0x1]
    %v296 = vlaneseq
    %v297 = vshrl.u32 %v296, 7
    %v298 = vsub.s32 0, %v297
    %v299 = vrot.slane %v294, %v298
    %v302 = vsel %vm215, %v289, 0
    %304 = vmatprep.subr.mxu0 0.0
    %305 = vmatpush1.msra.mxu0 0.0
    %306 = vmatprep.subr.mxu0 0.0
    %307 = vmatpush1.msra.mxu0 0.0
    %308 = vmatprep.subr.mxu0 0.0
    %309 = vmatpush1.msra.mxu0 0.0
    %310 = vmatprep.subr.mxu0 0.0
    %311 = vmatpush1.msra.mxu0 0.0
    %312 = vmatprep.subr.mxu0 0.0
    %313 = vmatpush1.msra.mxu0 0.0
    %314 = vmatprep.subr.mxu0 0.0
    %315 = vmatpush1.msra.mxu0 0.0
    %316 = vmatprep.subr.mxu0 0.0
    %317 = vmatpush1.msra.mxu0 0.0
    %318 = vmatprep.subr.mxu0 0.0
    %319 = vmatpush1.msra.mxu0 0.0
    %320 = vmatprep.subr.mxu0 0.0
    %321 = vmatpush1.msra.mxu0 0.0
    %322 = vmatprep.subr.mxu0 0.0
    %323 = vmatpush1.msra.mxu0 0.0
    %324 = vmatprep.subr.mxu0 0.0
    %325 = vmatpush1.msra.mxu0 0.0
    %326 = vmatprep.subr.mxu0 0.0
    %327 = vmatpush1.msra.mxu0 0.0
    %328 = vmatprep.subr.mxu0 0.0
    %329 = vmatpush1.msra.mxu0 %v293
    %330 = vmatprep.subr.mxu0 0.0
    %331 = vmatpush1.msra.mxu0 %v292
    %332 = vmatprep.subr.mxu0 0.0
    %333 = vmatpush1.msra.mxu0 %v291
    %334 = vmatprep.subr.mxu0 0.0
    %335 = vmatpush1.msra.mxu0 %v290
    %336 = vmatprep.subr.mxu0 0.0
    %337 = vmatpush2.msra.mxu0 0.0
    %338 = vmatprep.subr.mxu0 0.0
    %339 = vmatpush2.msra.mxu0 0.0
    %340 = vmatprep.subr.mxu0 0.0
    %341 = vmatpush2.msra.mxu0 0.0
    %342 = vmatprep.subr.mxu0 0.0
    %343 = vmatpush2.msra.mxu0 0.0
    %344 = vmatprep.subr.mxu0 0.0
    %345 = vmatpush2.msra.mxu0 0.0
    %346 = vmatprep.subr.mxu0 0.0
    %347 = vmatpush2.msra.mxu0 0.0
    %348 = vmatprep.subr.mxu0 0.0
    %349 = vmatpush2.msra.mxu0 0.0
    %350 = vmatprep.subr.mxu0 0.0
    %351 = vmatpush2.msra.mxu0 0.0
    %352 = vmatprep.subr.mxu0 0.0
    %353 = vmatpush2.msra.mxu0 0.0
    %354 = vmatprep.subr.mxu0 0.0
    %355 = vmatpush2.msra.mxu0 0.0
    %356 = vmatprep.subr.mxu0 0.0
    %357 = vmatpush2.msra.mxu0 0.0
    %358 = vmatprep.subr.mxu0 0.0
    %359 = vmatpush2.msra.mxu0 0.0
    %360 = vmatprep.subr.mxu0 0.0
    %361 = vmatpush2.msra.mxu0 0.0
    %362 = vmatprep.subr.mxu0 0.0
    %363 = vmatpush2.msra.mxu0 0.0
    %364 = vmatprep.subr.mxu0 0.0
    %365 = vmatpush2.msra.mxu0 0.0
    %366 = vmatprep.subr.mxu0 0.0
    %367 = vmatpush2.msra.mxu0 0.0
    %368 = vmatprep.mubr.f32.mxu0 0.0
    %369 = vmatmul.mubr.f32.gmra.mxu0 %v302
    %v370 = vpop.f32.mrf.mxu0
    %v371 = vadd.f32 %v299, %v370
    %v372 = vpop.f32.mrf.mxu0
    %373 = vdwg.mxu0
    %v374 = vmax.f32 %v371, 0.0
    %v375 = vld [vmem:[#allocation10] sm:$0xff]
    %v376 = vld [vmem:[#allocation10 + $0x8] sm:$0xff]
    %v377 = vld [vmem:[#allocation10 + $0x10] sm:$0xff]
    %v378 = vld [vmem:[#allocation10 + $0x18] sm:$0xff]
    %v379 = vld [vmem:[%s8] sm:$0x1]
    %v381 = vlaneseq
    %v382 = vshrl.u32 %v381, 7
    %v383 = vsub.s32 0, %v382
    %v384 = vrot.slane %v379, %v383
    %v387 = vsel %vm215, %v374, 0
    %389 = vmatprep.subr.mxu0 0.0
    %390 = vmatpush1.msra.mxu0 0.0
    %391 = vmatprep.subr.mxu0 0.0
    %392 = vmatpush1.msra.mxu0 0.0
    %393 = vmatprep.subr.mxu0 0.0
    %394 = vmatpush1.msra.mxu0 0.0
    %395 = vmatprep.subr.mxu0 0.0
    %396 = vmatpush1.msra.mxu0 0.0
    %397 = vmatprep.subr.mxu0 0.0
    %398 = vmatpush1.msra.mxu0 0.0
    %399 = vmatprep.subr.mxu0 0.0
    %400 = vmatpush1.msra.mxu0 0.0
    %401 = vmatprep.subr.mxu0 0.0
    %402 = vmatpush1.msra.mxu0 0.0
    %403 = vmatprep.subr.mxu0 0.0
    %404 = vmatpush1.msra.mxu0 0.0
    %405 = vmatprep.subr.mxu0 0.0
    %406 = vmatpush1.msra.mxu0 0.0
    %407 = vmatprep.subr.mxu0 0.0
    %408 = vmatpush1.msra.mxu0 0.0
    %409 = vmatprep.subr.mxu0 0.0
    %410 = vmatpush1.msra.mxu0 0.0
    %411 = vmatprep.subr.mxu0 0.0
    %412 = vmatpush1.msra.mxu0 0.0
    %413 = vmatprep.subr.mxu0 0.0
    %414 = vmatpush1.msra.mxu0 %v378
    %415 = vmatprep.subr.mxu0 0.0
    %416 = vmatpush1.msra.mxu0 %v377
    %417 = vmatprep.subr.mxu0 0.0
    %418 = vmatpush1.msra.mxu0 %v376
    %419 = vmatprep.subr.mxu0 0.0
    %420 = vmatpush1.msra.mxu0 %v375
    %421 = vmatprep.subr.mxu0 0.0
    %422 = vmatpush2.msra.mxu0 0.0
    %423 = vmatprep.subr.mxu0 0.0
    %424 = vmatpush2.msra.mxu0 0.0
    %425 = vmatprep.subr.mxu0 0.0
    %426 = vmatpush2.msra.mxu0 0.0
    %427 = vmatprep.subr.mxu0 0.0
    %428 = vmatpush2.msra.mxu0 0.0
    %429 = vmatprep.subr.mxu0 0.0
    %430 = vmatpush2.msra.mxu0 0.0
    %431 = vmatprep.subr.mxu0 0.0
    %432 = vmatpush2.msra.mxu0 0.0
    %433 = vmatprep.subr.mxu0 0.0
    %434 = vmatpush2.msra.mxu0 0.0
    %435 = vmatprep.subr.mxu0 0.0
    %436 = vmatpush2.msra.mxu0 0.0
    %437 = vmatprep.subr.mxu0 0.0
    %438 = vmatpush2.msra.mxu0 0.0
    %439 = vmatprep.subr.mxu0 0.0
    %440 = vmatpush2.msra.mxu0 0.0
    %441 = vmatprep.subr.mxu0 0.0
    %442 = vmatpush2.msra.mxu0 0.0
    %443 = vmatprep.subr.mxu0 0.0
    %444 = vmatpush2.msra.mxu0 0.0
    %445 = vmatprep.subr.mxu0 0.0
    %446 = vmatpush2.msra.mxu0 0.0
    %447 = vmatprep.subr.mxu0 0.0
    %448 = vmatpush2.msra.mxu0 0.0
    %449 = vmatprep.subr.mxu0 0.0
    %450 = vmatpush2.msra.mxu0 0.0
    %451 = vmatprep.subr.mxu0 0.0
    %452 = vmatpush2.msra.mxu0 0.0
    %453 = vmatprep.mubr.f32.mxu0 0.0
    %454 = vmatmul.mubr.f32.gmra.mxu0 %v387
    %v455 = vpop.f32.mrf.mxu0
    %v456 = vadd.f32 %v384, %v455
    %v457 = vpop.f32.mrf.mxu0
    %458 = vdwg.mxu0
    %v459 = vmax.f32 %v456, 0.0
    %v460 = vld [vmem:[#allocation11] sm:$0xff]
    %v461 = vld [vmem:[#allocation11 + $0x8] sm:$0xff]
    %v462 = vld [vmem:[#allocation11 + $0x10] sm:$0xff]
    %v463 = vld [vmem:[#allocation11 + $0x18] sm:$0xff]
    %v464 = vld [vmem:[%s10] sm:$0x1]
    %v466 = vlaneseq
    %v467 = vshrl.u32 %v466, 7
    %v468 = vsub.s32 0, %v467
    %v469 = vrot.slane %v464, %v468
    %v472 = vsel %vm215, %v459, 0
    %474 = vmatprep.subr.mxu0 0.0
    %475 = vmatpush1.msra.mxu0 0.0
    %476 = vmatprep.subr.mxu0 0.0
    %477 = vmatpush1.msra.mxu0 0.0
    %478 = vmatprep.subr.mxu0 0.0
    %479 = vmatpush1.msra.mxu0 0.0
    %480 = vmatprep.subr.mxu0 0.0
    %481 = vmatpush1.msra.mxu0 0.0
    %482 = vmatprep.subr.mxu0 0.0
    %483 = vmatpush1.msra.mxu0 0.0
    %484 = vmatprep.subr.mxu0 0.0
    %485 = vmatpush1.msra.mxu0 0.0
    %486 = vmatprep.subr.mxu0 0.0
    %487 = vmatpush1.msra.mxu0 0.0
    %488 = vmatprep.subr.mxu0 0.0
    %489 = vmatpush1.msra.mxu0 0.0
    %490 = vmatprep.subr.mxu0 0.0
    %491 = vmatpush1.msra.mxu0 0.0
    %492 = vmatprep.subr.mxu0 0.0
    %493 = vmatpush1.msra.mxu0 0.0
    %494 = vmatprep.subr.mxu0 0.0
    %495 = vmatpush1.msra.mxu0 0.0
    %496 = vmatprep.subr.mxu0 0.0
    %497 = vmatpush1.msra.mxu0 0.0
    %498 = vmatprep.subr.mxu0 0.0
    %499 = vmatpush1.msra.mxu0 %v463
    %500 = vmatprep.subr.mxu0 0.0
    %501 = vmatpush1.msra.mxu0 %v462
    %502 = vmatprep.subr.mxu0 0.0
    %503 = vmatpush1.msra.mxu0 %v461
    %504 = vmatprep.subr.mxu0 0.0
    %505 = vmatpush1.msra.mxu0 %v460
    %506 = vmatprep.subr.mxu0 0.0
    %507 = vmatpush2.msra.mxu0 0.0
    %508 = vmatprep.subr.mxu0 0.0
    %509 = vmatpush2.msra.mxu0 0.0
    %510 = vmatprep.subr.mxu0 0.0
    %511 = vmatpush2.msra.mxu0 0.0
    %512 = vmatprep.subr.mxu0 0.0
    %513 = vmatpush2.msra.mxu0 0.0
    %514 = vmatprep.subr.mxu0 0.0
    %515 = vmatpush2.msra.mxu0 0.0
    %516 = vmatprep.subr.mxu0 0.0
    %517 = vmatpush2.msra.mxu0 0.0
    %518 = vmatprep.subr.mxu0 0.0
    %519 = vmatpush2.msra.mxu0 0.0
    %520 = vmatprep.subr.mxu0 0.0
    %521 = vmatpush2.msra.mxu0 0.0
    %522 = vmatprep.subr.mxu0 0.0
    %523 = vmatpush2.msra.mxu0 0.0
    %524 = vmatprep.subr.mxu0 0.0
    %525 = vmatpush2.msra.mxu0 0.0
    %526 = vmatprep.subr.mxu0 0.0
    %527 = vmatpush2.msra.mxu0 0.0
    %528 = vmatprep.subr.mxu0 0.0
    %529 = vmatpush2.msra.mxu0 0.0
    %530 = vmatprep.subr.mxu0 0.0
    %531 = vmatpush2.msra.mxu0 0.0
    %532 = vmatprep.subr.mxu0 0.0
    %533 = vmatpush2.msra.mxu0 0.0
    %534 = vmatprep.subr.mxu0 0.0
    %535 = vmatpush2.msra.mxu0 0.0
    %536 = vmatprep.subr.mxu0 0.0
    %537 = vmatpush2.msra.mxu0 0.0
    %538 = vmatprep.mubr.f32.mxu0 0.0
    %539 = vmatmul.mubr.f32.gmra.mxu0 %v472
    %v540 = vpop.f32.mrf.mxu0
    %v541 = vadd.f32 %v469, %v540
    %v542 = vpop.f32.mrf.mxu0
    %543 = vdwg.mxu0
    %v544 = vlaneseq
    %v545 = vand.u32 %v544, 127
    %v546 = vmax.f32 %v541, -20.0
    %v547 = vmin.f32 %v546, 2.0
    %vm548 = vcmp.ge.s32.totalorder %v545, 4
    %v549 = vsel %vm548, %v547, %v541
    %550 = vst [vmem:[#allocation13] sm:$0xff] %v549
    // Predicated region
    $region70: #{tpu_custom_call.1} parent=1 // pred_check
      _
    $region71: #{tpu_custom_call.1} parent=1 // pred_check_branch
      %552 = sbr.rel (0) target = $region73
    $region72: #{tpu_custom_call.1} parent=1 // pred_region
      %s554 = ssub.s32 128, 128
      %555 = vsyncadd [#allocation4], %s554
      %s557 = sshll.u32 [#allocation13], 4
      %s558 = int_to_ptr.vmem [resolvable:$true] %s557
      %560 = dma.vmem_to_hbm [thread:$0]  %s558, 128, %s11, [#allocation4]
    $region73: #{tpu_custom_call.1} parent=1 // pred_fallthru
      _
    // Predicated region
    $region74: #{tpu_custom_call.1} parent=1 // pred_check
      _
    $region75: #{tpu_custom_call.1} parent=1 // pred_check_branch
      %562 = sbr.rel (0) target = $region77
    $region76: #{tpu_custom_call.1} parent=1 // pred_region
      %563 = dma.done [#allocation4], 128
    $region77: #{tpu_custom_call.1} parent=1 // pred_fallthru
      _
    %564 = vsyncpa [#allocation3], 1
    %565 = vsyncpa [#allocation6], 1
    %566 = vsyncpa [#allocation9], 1
    %567 = vsyncpa [#allocation12], 1
    %568 = vsyncpa [#allocation4], 1

</llo_original>
